<compile_context>
chip_gen: v6e
topology: v6e:2x2x1
jax: 0.10.0
libtpu: 0.0.40
codegen_flags: <defaults>
</compile_context>

<pallas_src>
import functools
import math

import jax
import jax.numpy as jnp
from jax.experimental import pallas as pl
from jax.experimental.pallas import tpu as pltpu


# ---------------------------------------------------------------------------
# Fused Pallas kernel: QKV proj -> per-head attention -> out proj -> +res -> LN
# ---------------------------------------------------------------------------

def _fused_mha_kernel(q_ref, k_ref, v_ref, wq_ref, wk_ref, wv_ref, wfc_ref,
                      g_ref, b_ref, out_ref, attn_ref, *,
                      n_head, d_k, d_v, eps, mxu_dtype):
    # One batch element per grid step; all heads processed in this step.
    def mx(x):
        # Cast MXU operands (bf16 on v6e/v7x), keep f32 accumulation.
        return x if mxu_dtype is None else x.astype(mxu_dtype)

    x_q = q_ref[0]                      # (len_q, d_model), original q (residual)
    x_k = k_ref[0]                      # (len_k, d_model)
    x_v = v_ref[0]                      # (len_v, d_model)

    # Fused bias-free QKV projections.  wq_ref is pre-scaled by 1/temperature.
    qp = jnp.dot(mx(x_q), wq_ref[...], preferred_element_type=jnp.float32)
    kp = jnp.dot(mx(x_k), wk_ref[...], preferred_element_type=jnp.float32)
    vp = jnp.dot(mx(x_v), wv_ref[...], preferred_element_type=jnp.float32)

    len_q = x_q.shape[0]
    d_model = out_ref.shape[-1]
    acc = jnp.zeros((len_q, d_model), jnp.float32)

    # Per-head attention; output projection folded in as a per-head partial
    # matmul (concat(o_h) @ W_fc == sum_h o_h @ W_fc[h*d_v:(h+1)*d_v, :]).
    for h in range(n_head):
        qh = qp[:, h * d_k:(h + 1) * d_k]            # (len_q, d_k)
        kh = kp[:, h * d_k:(h + 1) * d_k]            # (len_k, d_k)
        vh = vp[:, h * d_v:(h + 1) * d_v]            # (len_v, d_v)

        # Q @ K^T without an explicit transpose: contract last axes of both.
        s = jax.lax.dot_general(
            mx(qh), mx(kh), (((1,), (1,)), ((), ())),
            preferred_element_type=jnp.float32)      # (len_q, len_k)

        # Softmax over keys (temperature already folded into W_q).
        s = s - jnp.max(s, axis=-1, keepdims=True)
        e = jnp.exp(s)
        p = e * pl.reciprocal(jnp.sum(e, axis=-1, keepdims=True), approx=True)

        attn_ref[h, 0] = p.astype(attn_ref.dtype)

        oh = jnp.dot(mx(p), mx(vh), preferred_element_type=jnp.float32)  # (len_q, d_v)
        wfc_h = wfc_ref[h * d_v:(h + 1) * d_v, :]                        # (d_v, d_model)
        acc = acc + jnp.dot(mx(oh), wfc_h, preferred_element_type=jnp.float32)

    # Residual add + LayerNorm (PyTorch nn.LayerNorm, eps=1e-5).
    y = acc + x_q.astype(jnp.float32)
    mu = jnp.mean(y, axis=-1, keepdims=True)
    var = jnp.mean((y - mu) ** 2, axis=-1, keepdims=True)
    yhat = (y - mu) * jax.lax.rsqrt(var + eps)
    out_ref[0] = (yhat * g_ref[...].astype(jnp.float32)
                  + b_ref[...].astype(jnp.float32)).astype(out_ref.dtype)


# ---------------------------------------------------------------------------
# Module wrapper (parameter setup; single pallas_call per forward)
# ---------------------------------------------------------------------------

class MultiHeadAttentionPallas:
    def __init__(self, n_head, d_model, d_k, d_v, key, attn_type="softmax",
                 use_bf16_matmul=False):
        assert attn_type == "softmax"  # TODO(synk): sigmoid attn_type branch not exercised
        self.n_head = n_head
        self.d_model = d_model
        self.d_k = d_k
        self.d_v = d_v
        self.temperature = d_k ** 0.5
        self.use_bf16_matmul = use_bf16_matmul
        store_dtype = jnp.bfloat16 if use_bf16_matmul else jnp.float32

        k1, k2, k3, k4 = jax.random.split(key, 4)
        # PyTorch Linear stores (out, in) and computes x @ W.T; we store W.T
        # directly as (in, out).  Normal init is distributionally identical.
        std_qk = math.sqrt(2.0 / (d_model + d_k))
        std_v = math.sqrt(2.0 / (d_model + d_v))
        self.w_qs = (jax.random.normal(k1, (d_model, n_head * d_k)) * std_qk).astype(jnp.float32)
        self.w_ks = (jax.random.normal(k2, (d_model, n_head * d_k)) * std_qk).astype(jnp.float32)
        self.w_vs = (jax.random.normal(k3, (d_model, n_head * d_v)) * std_v).astype(jnp.float32)
        if n_head > 1:
            # xavier_normal_: std = sqrt(2 / (fan_in + fan_out))
            std_fc = math.sqrt(2.0 / (n_head * d_v + d_model))
            self.w_fc = (jax.random.normal(k4, (n_head * d_v, d_model)) * std_fc).astype(jnp.float32)
        else:
            self.w_fc = None
        self.gamma = jnp.ones((1, d_model), jnp.float32)
        self.beta = jnp.zeros((1, d_model), jnp.float32)

        # Kernel-side copies: 1/temperature folded into W_q at init (free);
        # pre-cast to bf16 when requested so weight DMA is halved too.
        self._wq_k = (self.w_qs * (1.0 / self.temperature)).astype(store_dtype)
        self._wk_k = self.w_ks.astype(store_dtype)
        self._wv_k = self.w_vs.astype(store_dtype)
        if self.w_fc is not None:
            self._wfc_k = self.w_fc.astype(store_dtype)
        else:
            # n_head == 1: no fc layer; identity weight is numerically the same
            # path (requires d_v == d_model, as the PyTorch module implies).
            assert d_v == d_model
            self._wfc_k = jnp.eye(d_v, d_model, dtype=store_dtype)

    def __call__(self, q, k, v):
        n_head, d_k, d_v, d_model = self.n_head, self.d_k, self.d_v, self.d_model
        sz_b, len_q, _ = q.shape
        _, len_k, _ = k.shape
        _, len_v, _ = v.shape

        kernel = functools.partial(
            _fused_mha_kernel,
            n_head=n_head, d_k=d_k, d_v=d_v, eps=1e-5,
            mxu_dtype=jnp.bfloat16 if self.use_bf16_matmul else None)

        out, attn = pl.pallas_call(
            kernel,
            out_shape=(
                jax.ShapeDtypeStruct((sz_b, len_q, d_model), q.dtype),
                # heads-major layout so the final reshape is a free merge.
                jax.ShapeDtypeStruct((n_head, sz_b, len_q, len_k), q.dtype),
            ),
            grid=(sz_b,),
            in_specs=[
                pl.BlockSpec((1, len_q, d_model), lambda b: (b, 0, 0)),
                pl.BlockSpec((1, len_k, d_model), lambda b: (b, 0, 0)),
                pl.BlockSpec((1, len_v, d_model), lambda b: (b, 0, 0)),
                pl.BlockSpec((d_model, n_head * d_k), lambda b: (0, 0)),
                pl.BlockSpec((d_model, n_head * d_k), lambda b: (0, 0)),
                pl.BlockSpec((d_model, n_head * d_v), lambda b: (0, 0)),
                pl.BlockSpec((n_head * d_v, d_model), lambda b: (0, 0)),
                pl.BlockSpec((1, d_model), lambda b: (0, 0)),
                pl.BlockSpec((1, d_model), lambda b: (0, 0)),
            ],
            out_specs=(
                pl.BlockSpec((1, len_q, d_model), lambda b: (b, 0, 0)),
                pl.BlockSpec((n_head, 1, len_q, len_k), lambda b: (0, b, 0, 0)),
            ),
            compiler_params=pltpu.CompilerParams(
                dimension_semantics=("parallel",)),
        )(q, k, v, self._wq_k, self._wk_k, self._wv_k, self._wfc_k,
          self.gamma, self.beta)

        # (n_head, sz_b, len_q, len_k) -> (n_head*sz_b, len_q, len_k): leading-dim
        # merge of a contiguous array, no transpose/copy.
        return out, attn.reshape(n_head * sz_b, len_q, len_k)


# ---------------------------------------------------------------------------
# Pure-JAX reference (for correctness check)
# ---------------------------------------------------------------------------

def reference_forward(mha, q, k, v):
    n_head, d_k, d_v, d_model = mha.n_head, mha.d_k, mha.d_v, mha.d_model
    sz_b, len_q, _ = q.shape
    residual = q
    qp = (q.reshape(-1, d_model) @ mha.w_qs).reshape(sz_b, len_q, n_head, d_k)
    kp = (k.reshape(-1, d_model) @ mha.w_ks).reshape(sz_b, -1, n_head, d_k)
    vp = (v.reshape(-1, d_model) @ mha.w_vs).reshape(sz_b, -1, n_head, d_v)
    qh = jnp.transpose(qp, (2, 0, 1, 3)).reshape(-1, len_q, d_k)
    kh = jnp.transpose(kp, (2, 0, 1, 3)).reshape(-1, kp.shape[1], d_k)
    vh = jnp.transpose(vp, (2, 0, 1, 3)).reshape(-1, vp.shape[1], d_v)
    s = jnp.einsum("bqd,bkd->bqk", qh, kh) / mha.temperature
    p = jax.nn.softmax(s, axis=-1)
    o = jnp.einsum("bqk,bkd->bqd", p, vh)
    o = o.reshape(n_head, sz_b, len_q, d_v)
    o = jnp.transpose(o, (1, 2, 0, 3)).reshape(sz_b * len_q, n_head * d_v)
    if mha.w_fc is not None:
        o = o @ mha.w_fc
    y = o + residual.reshape(-1, d_model)
    mu = jnp.mean(y, axis=-1, keepdims=True)
    var = jnp.mean((y - mu) ** 2, axis=-1, keepdims=True)
    y = (y - mu) / jnp.sqrt(var + 1e-5)
    return y.reshape(sz_b, len_q, d_model), p


# ---------------------------------------------------------------------------
# Main
# ---------------------------------------------------------------------------

if __name__ == "__main__":
    key = jax.random.PRNGKey(0)
    kparam, kq, kk, kv = jax.random.split(key, 4)

    # Small shapes consistent with the module: batch=2, seq=8, d_model=32,
    # n_head=4, d_k=d_v=8.
    sz_b, seq, d_model = 2, 8, 32
    n_head, d_k, d_v = 4, 8, 8

    q = jax.random.normal(kq, (sz_b, seq, d_model), jnp.float32)
    k = jax.random.normal(kk, (sz_b, seq, d_model), jnp.float32)
    v = jax.random.normal(kv, (sz_b, seq, d_model), jnp.float32)

    # f32 MXU operands (tolerance loosened slightly only for the EUP approx
    # reciprocal in the softmax denominator).
    mha = MultiHeadAttentionPallas(n_head, d_model, d_k, d_v, key=kparam)
    out, attn = mha(q, k, v)
    out = jax.block_until_ready(out)
    attn = jax.block_until_ready(attn)

    out_ref, attn_ref = reference_forward(mha, q, k, v)
    assert out.shape == (sz_b, seq, d_model)
    assert attn.shape == (n_head * sz_b, seq, seq)
    assert jnp.allclose(attn, attn_ref, atol=5e-3, rtol=5e-3)
    assert jnp.allclose(out, out_ref, atol=5e-3, rtol=5e-3)

    # bf16 MXU operands with f32 accumulation (v6e/v7x recommendation);
    # same weights, looser tolerance.
    mha_bf16 = MultiHeadAttentionPallas(n_head, d_model, d_k, d_v, key=kparam,
                                        use_bf16_matmul=True)
    out16, attn16 = mha_bf16(q, k, v)
    out16 = jax.block_until_ready(out16)
    attn16 = jax.block_until_ready(attn16)
    assert jnp.allclose(out16, out_ref, atol=5e-2, rtol=5e-2)
    assert jnp.allclose(attn16, attn_ref, atol=5e-2, rtol=5e-2)

    print("KERNEL_OK")
</pallas_src>

<mosaic_0001>
module attributes {stable_mosaic.version = 11 : i64} {
  func.func @_fused_mha_kernel(%arg0: i32, %arg1: memref<1x8x32xf32, #tpu.memory_space<vmem>>, %arg2: memref<1x8x32xf32, #tpu.memory_space<vmem>>, %arg3: memref<1x8x32xf32, #tpu.memory_space<vmem>>, %arg4: memref<32x32xf32, #tpu.memory_space<vmem>>, %arg5: memref<32x32xf32, #tpu.memory_space<vmem>>, %arg6: memref<32x32xf32, #tpu.memory_space<vmem>>, %arg7: memref<32x32xf32, #tpu.memory_space<vmem>>, %arg8: memref<1x32xf32, #tpu.memory_space<vmem>>, %arg9: memref<1x32xf32, #tpu.memory_space<vmem>>, %arg10: memref<1x8x32xf32, #tpu.memory_space<vmem>>, %arg11: memref<4x1x8x8xf32, #tpu.memory_space<vmem>>) attributes {dimension_semantics = [#tpu.dimension_semantics<parallel>], iteration_bounds = array<i64: 2>, scalar_prefetch = 0 : i64, scratch_operands = 0 : i64, tpu.core_type = #tpu.core_type<tc>, window_params = [{transform_indices = @transform_0, window_bounds = array<i64: 1, 8, 32>}, {transform_indices = @transform_1, window_bounds = array<i64: 1, 8, 32>}, {transform_indices = @transform_2, window_bounds = array<i64: 1, 8, 32>}, {pipeline_mode = #tpu.pipeline_mode<synchronous>, transform_indices = @transform_3, window_bounds = array<i64: 32, 32>}, {pipeline_mode = #tpu.pipeline_mode<synchronous>, transform_indices = @transform_4, window_bounds = array<i64: 32, 32>}, {pipeline_mode = #tpu.pipeline_mode<synchronous>, transform_indices = @transform_5, window_bounds = array<i64: 32, 32>}, {pipeline_mode = #tpu.pipeline_mode<synchronous>, transform_indices = @transform_6, window_bounds = array<i64: 32, 32>}, {pipeline_mode = #tpu.pipeline_mode<synchronous>, transform_indices = @transform_7, window_bounds = array<i64: 1, 32>}, {pipeline_mode = #tpu.pipeline_mode<synchronous>, transform_indices = @transform_8, window_bounds = array<i64: 1, 32>}, {transform_indices = @transform_9, window_bounds = array<i64: 1, 8, 32>}, {transform_indices = @transform_10, window_bounds = array<i64: 4, 1, 8, 8>}]} {
    %c0 = arith.constant 0 : index
    %c0_0 = arith.constant 0 : index
    %c0_1 = arith.constant 0 : index
    %0 = vector.load %arg1[%c0, %c0_0, %c0_1] : memref<1x8x32xf32, #tpu.memory_space<vmem>>, vector<1x8x32xf32>
    %1 = vector.shape_cast %0 : vector<1x8x32xf32> to vector<8x32xf32>
    %c0_2 = arith.constant 0 : index
    %c0_3 = arith.constant 0 : index
    %c0_4 = arith.constant 0 : index
    %2 = vector.load %arg2[%c0_2, %c0_3, %c0_4] : memref<1x8x32xf32, #tpu.memory_space<vmem>>, vector<1x8x32xf32>
    %3 = vector.shape_cast %2 : vector<1x8x32xf32> to vector<8x32xf32>
    %c0_5 = arith.constant 0 : index
    %c0_6 = arith.constant 0 : index
    %c0_7 = arith.constant 0 : index
    %4 = vector.load %arg3[%c0_5, %c0_6, %c0_7] : memref<1x8x32xf32, #tpu.memory_space<vmem>>, vector<1x8x32xf32>
    %5 = vector.shape_cast %4 : vector<1x8x32xf32> to vector<8x32xf32>
    %c0_8 = arith.constant 0 : index
    %c0_9 = arith.constant 0 : index
    %6 = vector.load %arg4[%c0_8, %c0_9] : memref<32x32xf32, #tpu.memory_space<vmem>>, vector<32x32xf32>
    %cst = arith.constant dense<0.000000e+00> : vector<8x32xf32>
    %7 = tpu.matmul %1, %6, %cst {dimension_numbers = #tpu.dot_dimension_numbers<[1], [0], [0], [1], [0, 0, 1, 1], [], []>} : vector<8x32xf32>, vector<32x32xf32>, vector<8x32xf32> -> vector<8x32xf32>
    %c0_10 = arith.constant 0 : index
    %c0_11 = arith.constant 0 : index
    %8 = vector.load %arg5[%c0_10, %c0_11] : memref<32x32xf32, #tpu.memory_space<vmem>>, vector<32x32xf32>
    %cst_12 = arith.constant dense<0.000000e+00> : vector<8x32xf32>
    %9 = tpu.matmul %3, %8, %cst_12 {dimension_numbers = #tpu.dot_dimension_numbers<[1], [0], [0], [1], [0, 0, 1, 1], [], []>} : vector<8x32xf32>, vector<32x32xf32>, vector<8x32xf32> -> vector<8x32xf32>
    %c0_13 = arith.constant 0 : index
    %c0_14 = arith.constant 0 : index
    %10 = vector.load %arg6[%c0_13, %c0_14] : memref<32x32xf32, #tpu.memory_space<vmem>>, vector<32x32xf32>
    %cst_15 = arith.constant dense<0.000000e+00> : vector<8x32xf32>
    %11 = tpu.matmul %5, %10, %cst_15 {dimension_numbers = #tpu.dot_dimension_numbers<[1], [0], [0], [1], [0, 0, 1, 1], [], []>} : vector<8x32xf32>, vector<32x32xf32>, vector<8x32xf32> -> vector<8x32xf32>
    %cst_16 = arith.constant 0.000000e+00 : f32
    %12 = vector.broadcast %cst_16 : f32 to vector<8x32xf32>
    %13 = vector.extract_strided_slice %7 {offsets = [0, 0], sizes = [8, 8], strides = [1, 1]} : vector<8x32xf32> to vector<8x8xf32>
    %14 = vector.extract_strided_slice %9 {offsets = [0, 0], sizes = [8, 8], strides = [1, 1]} : vector<8x32xf32> to vector<8x8xf32>
    %15 = vector.extract_strided_slice %11 {offsets = [0, 0], sizes = [8, 8], strides = [1, 1]} : vector<8x32xf32> to vector<8x8xf32>
    %cst_17 = arith.constant dense<0.000000e+00> : vector<8x8xf32>
    %16 = tpu.matmul %13, %14, %cst_17 {dimension_numbers = #tpu.dot_dimension_numbers<[1], [1], [0], [0], [0, 0, 1, 0], [], []>} : vector<8x8xf32>, vector<8x8xf32>, vector<8x8xf32> -> vector<8x8xf32>
    %cst_18 = arith.constant dense<0xFF800000> : vector<8xf32>
    %17 = vector.multi_reduction <maximumf>, %16, %cst_18 [1] : vector<8x8xf32> to vector<8xf32>
    %18 = vector.shape_cast %17 : vector<8xf32> to vector<8x1xf32>
    %19 = vector.broadcast %18 : vector<8x1xf32> to vector<8x8xf32>
    %20 = arith.subf %16, %19 : vector<8x8xf32>
    %21 = math.exp %20 : vector<8x8xf32>
    %cst_19 = arith.constant dense<0.000000e+00> : vector<8xf32>
    %22 = vector.multi_reduction <add>, %21, %cst_19 [1] : vector<8x8xf32> to vector<8xf32>
    %23 = vector.shape_cast %22 : vector<8xf32> to vector<8x1xf32>
    %24 = tpu.reciprocal %23 {approx = true} : vector<8x1xf32> -> vector<8x1xf32>
    %25 = vector.broadcast %24 : vector<8x1xf32> to vector<8x8xf32>
    %26 = arith.mulf %21, %25 : vector<8x8xf32>
    %c0_20 = arith.constant 0 : index
    %c0_21 = arith.constant 0 : index
    %c0_22 = arith.constant 0 : index
    %c0_23 = arith.constant 0 : index
    %27 = vector.load %arg11[%c0_20, %c0_21, %c0_22, %c0_23] : memref<4x1x8x8xf32, #tpu.memory_space<vmem>>, vector<1x1x8x8xf32>
    %28 = vector.shape_cast %27 : vector<1x1x8x8xf32> to vector<8x8xf32>
    %29 = vector.shape_cast %26 : vector<8x8xf32> to vector<1x1x8x8xf32>
    tpu.vector_store %arg11[%c0_20, %c0_21, %c0_22, %c0_23], %29 {strides = array<i32>} : memref<4x1x8x8xf32, #tpu.memory_space<vmem>>, vector<1x1x8x8xf32>,
    %cst_24 = arith.constant dense<0.000000e+00> : vector<8x8xf32>
    %30 = tpu.matmul %26, %15, %cst_24 {dimension_numbers = #tpu.dot_dimension_numbers<[1], [0], [0], [1], [0, 0, 1, 1], [], []>} : vector<8x8xf32>, vector<8x8xf32>, vector<8x8xf32> -> vector<8x8xf32>
    %c0_25 = arith.constant 0 : index
    %c0_26 = arith.constant 0 : index
    %31 = vector.load %arg7[%c0_25, %c0_26] : memref<32x32xf32, #tpu.memory_space<vmem>>, vector<8x32xf32>
    %cst_27 = arith.constant dense<0.000000e+00> : vector<8x32xf32>
    %32 = tpu.matmul %30, %31, %cst_27 {dimension_numbers = #tpu.dot_dimension_numbers<[1], [0], [0], [1], [0, 0, 1, 1], [], []>} : vector<8x8xf32>, vector<8x32xf32>, vector<8x32xf32> -> vector<8x32xf32>
    %33 = arith.addf %12, %32 : vector<8x32xf32>
    %34 = vector.extract_strided_slice %7 {offsets = [0, 8], sizes = [8, 8], strides = [1, 1]} : vector<8x32xf32> to vector<8x8xf32>
    %35 = vector.extract_strided_slice %9 {offsets = [0, 8], sizes = [8, 8], strides = [1, 1]} : vector<8x32xf32> to vector<8x8xf32>
    %36 = vector.extract_strided_slice %11 {offsets = [0, 8], sizes = [8, 8], strides = [1, 1]} : vector<8x32xf32> to vector<8x8xf32>
    %cst_28 = arith.constant dense<0.000000e+00> : vector<8x8xf32>
    %37 = tpu.matmul %34, %35, %cst_28 {dimension_numbers = #tpu.dot_dimension_numbers<[1], [1], [0], [0], [0, 0, 1, 0], [], []>} : vector<8x8xf32>, vector<8x8xf32>, vector<8x8xf32> -> vector<8x8xf32>
    %cst_29 = arith.constant dense<0xFF800000> : vector<8xf32>
    %38 = vector.multi_reduction <maximumf>, %37, %cst_29 [1] : vector<8x8xf32> to vector<8xf32>
    %39 = vector.shape_cast %38 : vector<8xf32> to vector<8x1xf32>
    %40 = vector.broadcast %39 : vector<8x1xf32> to vector<8x8xf32>
    %41 = arith.subf %37, %40 : vector<8x8xf32>
    %42 = math.exp %41 : vector<8x8xf32>
    %cst_30 = arith.constant dense<0.000000e+00> : vector<8xf32>
    %43 = vector.multi_reduction <add>, %42, %cst_30 [1] : vector<8x8xf32> to vector<8xf32>
    %44 = vector.shape_cast %43 : vector<8xf32> to vector<8x1xf32>
    %45 = tpu.reciprocal %44 {approx = true} : vector<8x1xf32> -> vector<8x1xf32>
    %46 = vector.broadcast %45 : vector<8x1xf32> to vector<8x8xf32>
    %47 = arith.mulf %42, %46 : vector<8x8xf32>
    %c1 = arith.constant 1 : index
    %c0_31 = arith.constant 0 : index
    %c0_32 = arith.constant 0 : index
    %c0_33 = arith.constant 0 : index
    %48 = vector.load %arg11[%c1, %c0_31, %c0_32, %c0_33] : memref<4x1x8x8xf32, #tpu.memory_space<vmem>>, vector<1x1x8x8xf32>
    %49 = vector.shape_cast %48 : vector<1x1x8x8xf32> to vector<8x8xf32>
    %50 = vector.shape_cast %47 : vector<8x8xf32> to vector<1x1x8x8xf32>
    tpu.vector_store %arg11[%c1, %c0_31, %c0_32, %c0_33], %50 {strides = array<i32>} : memref<4x1x8x8xf32, #tpu.memory_space<vmem>>, vector<1x1x8x8xf32>,
    %cst_34 = arith.constant dense<0.000000e+00> : vector<8x8xf32>
    %51 = tpu.matmul %47, %36, %cst_34 {dimension_numbers = #tpu.dot_dimension_numbers<[1], [0], [0], [1], [0, 0, 1, 1], [], []>} : vector<8x8xf32>, vector<8x8xf32>, vector<8x8xf32> -> vector<8x8xf32>
    %c8 = arith.constant 8 : index
    %c0_35 = arith.constant 0 : index
    %52 = vector.load %arg7[%c8, %c0_35] : memref<32x32xf32, #tpu.memory_space<vmem>>, vector<8x32xf32>
    %cst_36 = arith.constant dense<0.000000e+00> : vector<8x32xf32>
    %53 = tpu.matmul %51, %52, %cst_36 {dimension_numbers = #tpu.dot_dimension_numbers<[1], [0], [0], [1], [0, 0, 1, 1], [], []>} : vector<8x8xf32>, vector<8x32xf32>, vector<8x32xf32> -> vector<8x32xf32>
    %54 = arith.addf %33, %53 : vector<8x32xf32>
    %55 = vector.extract_strided_slice %7 {offsets = [0, 16], sizes = [8, 8], strides = [1, 1]} : vector<8x32xf32> to vector<8x8xf32>
    %56 = vector.extract_strided_slice %9 {offsets = [0, 16], sizes = [8, 8], strides = [1, 1]} : vector<8x32xf32> to vector<8x8xf32>
    %57 = vector.extract_strided_slice %11 {offsets = [0, 16], sizes = [8, 8], strides = [1, 1]} : vector<8x32xf32> to vector<8x8xf32>
    %cst_37 = arith.constant dense<0.000000e+00> : vector<8x8xf32>
    %58 = tpu.matmul %55, %56, %cst_37 {dimension_numbers = #tpu.dot_dimension_numbers<[1], [1], [0], [0], [0, 0, 1, 0], [], []>} : vector<8x8xf32>, vector<8x8xf32>, vector<8x8xf32> -> vector<8x8xf32>
    %cst_38 = arith.constant dense<0xFF800000> : vector<8xf32>
    %59 = vector.multi_reduction <maximumf>, %58, %cst_38 [1] : vector<8x8xf32> to vector<8xf32>
    %60 = vector.shape_cast %59 : vector<8xf32> to vector<8x1xf32>
    %61 = vector.broadcast %60 : vector<8x1xf32> to vector<8x8xf32>
    %62 = arith.subf %58, %61 : vector<8x8xf32>
    %63 = math.exp %62 : vector<8x8xf32>
    %cst_39 = arith.constant dense<0.000000e+00> : vector<8xf32>
    %64 = vector.multi_reduction <add>, %63, %cst_39 [1] : vector<8x8xf32> to vector<8xf32>
    %65 = vector.shape_cast %64 : vector<8xf32> to vector<8x1xf32>
    %66 = tpu.reciprocal %65 {approx = true} : vector<8x1xf32> -> vector<8x1xf32>
    %67 = vector.broadcast %66 : vector<8x1xf32> to vector<8x8xf32>
    %68 = arith.mulf %63, %67 : vector<8x8xf32>
    %c2 = arith.constant 2 : index
    %c0_40 = arith.constant 0 : index
    %c0_41 = arith.constant 0 : index
    %c0_42 = arith.constant 0 : index
    %69 = vector.load %arg11[%c2, %c0_40, %c0_41, %c0_42] : memref<4x1x8x8xf32, #tpu.memory_space<vmem>>, vector<1x1x8x8xf32>
    %70 = vector.shape_cast %69 : vector<1x1x8x8xf32> to vector<8x8xf32>
    %71 = vector.shape_cast %68 : vector<8x8xf32> to vector<1x1x8x8xf32>
    tpu.vector_store %arg11[%c2, %c0_40, %c0_41, %c0_42], %71 {strides = array<i32>} : memref<4x1x8x8xf32, #tpu.memory_space<vmem>>, vector<1x1x8x8xf32>,
    %cst_43 = arith.constant dense<0.000000e+00> : vector<8x8xf32>
    %72 = tpu.matmul %68, %57, %cst_43 {dimension_numbers = #tpu.dot_dimension_numbers<[1], [0], [0], [1], [0, 0, 1, 1], [], []>} : vector<8x8xf32>, vector<8x8xf32>, vector<8x8xf32> -> vector<8x8xf32>
    %c16 = arith.constant 16 : index
    %c0_44 = arith.constant 0 : index
    %73 = vector.load %arg7[%c16, %c0_44] : memref<32x32xf32, #tpu.memory_space<vmem>>, vector<8x32xf32>
    %cst_45 = arith.constant dense<0.000000e+00> : vector<8x32xf32>
    %74 = tpu.matmul %72, %73, %cst_45 {dimension_numbers = #tpu.dot_dimension_numbers<[1], [0], [0], [1], [0, 0, 1, 1], [], []>} : vector<8x8xf32>, vector<8x32xf32>, vector<8x32xf32> -> vector<8x32xf32>
    %75 = arith.addf %54, %74 : vector<8x32xf32>
    %76 = vector.extract_strided_slice %7 {offsets = [0, 24], sizes = [8, 8], strides = [1, 1]} : vector<8x32xf32> to vector<8x8xf32>
    %77 = vector.extract_strided_slice %9 {offsets = [0, 24], sizes = [8, 8], strides = [1, 1]} : vector<8x32xf32> to vector<8x8xf32>
    %78 = vector.extract_strided_slice %11 {offsets = [0, 24], sizes = [8, 8], strides = [1, 1]} : vector<8x32xf32> to vector<8x8xf32>
    %cst_46 = arith.constant dense<0.000000e+00> : vector<8x8xf32>
    %79 = tpu.matmul %76, %77, %cst_46 {dimension_numbers = #tpu.dot_dimension_numbers<[1], [1], [0], [0], [0, 0, 1, 0], [], []>} : vector<8x8xf32>, vector<8x8xf32>, vector<8x8xf32> -> vector<8x8xf32>
    %cst_47 = arith.constant dense<0xFF800000> : vector<8xf32>
    %80 = vector.multi_reduction <maximumf>, %79, %cst_47 [1] : vector<8x8xf32> to vector<8xf32>
    %81 = vector.shape_cast %80 : vector<8xf32> to vector<8x1xf32>
    %82 = vector.broadcast %81 : vector<8x1xf32> to vector<8x8xf32>
    %83 = arith.subf %79, %82 : vector<8x8xf32>
    %84 = math.exp %83 : vector<8x8xf32>
    %cst_48 = arith.constant dense<0.000000e+00> : vector<8xf32>
    %85 = vector.multi_reduction <add>, %84, %cst_48 [1] : vector<8x8xf32> to vector<8xf32>
    %86 = vector.shape_cast %85 : vector<8xf32> to vector<8x1xf32>
    %87 = tpu.reciprocal %86 {approx = true} : vector<8x1xf32> -> vector<8x1xf32>
    %88 = vector.broadcast %87 : vector<8x1xf32> to vector<8x8xf32>
    %89 = arith.mulf %84, %88 : vector<8x8xf32>
    %c3 = arith.constant 3 : index
    %c0_49 = arith.constant 0 : index
    %c0_50 = arith.constant 0 : index
    %c0_51 = arith.constant 0 : index
    %90 = vector.load %arg11[%c3, %c0_49, %c0_50, %c0_51] : memref<4x1x8x8xf32, #tpu.memory_space<vmem>>, vector<1x1x8x8xf32>
    %91 = vector.shape_cast %90 : vector<1x1x8x8xf32> to vector<8x8xf32>
    %92 = vector.shape_cast %89 : vector<8x8xf32> to vector<1x1x8x8xf32>
    tpu.vector_store %arg11[%c3, %c0_49, %c0_50, %c0_51], %92 {strides = array<i32>} : memref<4x1x8x8xf32, #tpu.memory_space<vmem>>, vector<1x1x8x8xf32>,
    %cst_52 = arith.constant dense<0.000000e+00> : vector<8x8xf32>
    %93 = tpu.matmul %89, %78, %cst_52 {dimension_numbers = #tpu.dot_dimension_numbers<[1], [0], [0], [1], [0, 0, 1, 1], [], []>} : vector<8x8xf32>, vector<8x8xf32>, vector<8x8xf32> -> vector<8x8xf32>
    %c24 = arith.constant 24 : index
    %c0_53 = arith.constant 0 : index
    %94 = vector.load %arg7[%c24, %c0_53] : memref<32x32xf32, #tpu.memory_space<vmem>>, vector<8x32xf32>
    %cst_54 = arith.constant dense<0.000000e+00> : vector<8x32xf32>
    %95 = tpu.matmul %93, %94, %cst_54 {dimension_numbers = #tpu.dot_dimension_numbers<[1], [0], [0], [1], [0, 0, 1, 1], [], []>} : vector<8x8xf32>, vector<8x32xf32>, vector<8x32xf32> -> vector<8x32xf32>
    %96 = arith.addf %75, %95 : vector<8x32xf32>
    %97 = arith.addf %96, %1 : vector<8x32xf32>
    %cst_55 = arith.constant dense<0.000000e+00> : vector<8xf32>
    %98 = vector.multi_reduction <add>, %97, %cst_55 [1] : vector<8x32xf32> to vector<8xf32>
    %99 = vector.shape_cast %98 : vector<8xf32> to vector<8x1xf32>
    %cst_56 = arith.constant 3.200000e+01 : f32
    %100 = vector.broadcast %cst_56 : f32 to vector<8x1xf32>
    %101 = arith.divf %99, %100 : vector<8x1xf32>
    %102 = vector.broadcast %101 : vector<8x1xf32> to vector<8x32xf32>
    %103 = arith.subf %97, %102 : vector<8x32xf32>
    %104 = arith.mulf %103, %103 : vector<8x32xf32>
    %cst_57 = arith.constant dense<0.000000e+00> : vector<8xf32>
    %105 = vector.multi_reduction <add>, %104, %cst_57 [1] : vector<8x32xf32> to vector<8xf32>
    %106 = vector.shape_cast %105 : vector<8xf32> to vector<8x1xf32>
    %cst_58 = arith.constant 3.200000e+01 : f32
    %107 = vector.broadcast %cst_58 : f32 to vector<8x1xf32>
    %108 = arith.divf %106, %107 : vector<8x1xf32>
    %109 = vector.broadcast %101 : vector<8x1xf32> to vector<8x32xf32>
    %110 = arith.subf %97, %109 : vector<8x32xf32>
    %cst_59 = arith.constant 9.99999974E-6 : f32
    %111 = vector.broadcast %cst_59 : f32 to vector<8x1xf32>
    %112 = arith.addf %108, %111 : vector<8x1xf32>
    %113 = math.rsqrt %112 : vector<8x1xf32>
    %114 = vector.broadcast %113 : vector<8x1xf32> to vector<8x32xf32>
    %115 = arith.mulf %110, %114 : vector<8x32xf32>
    %c0_60 = arith.constant 0 : index
    %c0_61 = arith.constant 0 : index
    %116 = vector.load %arg8[%c0_60, %c0_61] : memref<1x32xf32, #tpu.memory_space<vmem>>, vector<1x32xf32>
    %117 = vector.broadcast %116 : vector<1x32xf32> to vector<8x32xf32>
    %118 = arith.mulf %115, %117 : vector<8x32xf32>
    %c0_62 = arith.constant 0 : index
    %c0_63 = arith.constant 0 : index
    %119 = vector.load %arg9[%c0_62, %c0_63] : memref<1x32xf32, #tpu.memory_space<vmem>>, vector<1x32xf32>
    %120 = vector.broadcast %119 : vector<1x32xf32> to vector<8x32xf32>
    %121 = arith.addf %118, %120 : vector<8x32xf32>
    %c0_64 = arith.constant 0 : index
    %c0_65 = arith.constant 0 : index
    %c0_66 = arith.constant 0 : index
    %122 = vector.load %arg10[%c0_64, %c0_65, %c0_66] : memref<1x8x32xf32, #tpu.memory_space<vmem>>, vector<1x8x32xf32>
    %123 = vector.shape_cast %122 : vector<1x8x32xf32> to vector<8x32xf32>
    %124 = vector.shape_cast %121 : vector<8x32xf32> to vector<1x8x32xf32>
    tpu.vector_store %arg10[%c0_64, %c0_65, %c0_66], %124 {strides = array<i32>} : memref<1x8x32xf32, #tpu.memory_space<vmem>>, vector<1x8x32xf32>,
    return
  }
  func.func @transform_0(%arg0: i32) -> (i32, i32, i32) {
    %c0_i32 = arith.constant 0 : i32
    %c0_i32_0 = arith.constant 0 : i32
    %c0_i32_1 = arith.constant 0 : i32
    return %arg0, %c0_i32, %c0_i32_0 : i32, i32, i32
  }
  func.func @transform_1(%arg0: i32) -> (i32, i32, i32) {
    %c0_i32 = arith.constant 0 : i32
    %c0_i32_0 = arith.constant 0 : i32
    %c0_i32_1 = arith.constant 0 : i32
    return %arg0, %c0_i32, %c0_i32_0 : i32, i32, i32
  }
  func.func @transform_2(%arg0: i32) -> (i32, i32, i32) {
    %c0_i32 = arith.constant 0 : i32
    %c0_i32_0 = arith.constant 0 : i32
    %c0_i32_1 = arith.constant 0 : i32
    return %arg0, %c0_i32, %c0_i32_0 : i32, i32, i32
  }
  func.func @transform_3(%arg0: i32) -> (i32, i32) {
    %c0_i32 = arith.constant 0 : i32
    %c0_i32_0 = arith.constant 0 : i32
    %c0_i32_1 = arith.constant 0 : i32
    return %c0_i32, %c0_i32_0 : i32, i32
  }
  func.func @transform_4(%arg0: i32) -> (i32, i32) {
    %c0_i32 = arith.constant 0 : i32
    %c0_i32_0 = arith.constant 0 : i32
    %c0_i32_1 = arith.constant 0 : i32
    return %c0_i32, %c0_i32_0 : i32, i32
  }
  func.func @transform_5(%arg0: i32) -> (i32, i32) {
    %c0_i32 = arith.constant 0 : i32
    %c0_i32_0 = arith.constant 0 : i32
    %c0_i32_1 = arith.constant 0 : i32
    return %c0_i32, %c0_i32_0 : i32, i32
  }
  func.func @transform_6(%arg0: i32) -> (i32, i32) {
    %c0_i32 = arith.constant 0 : i32
    %c0_i32_0 = arith.constant 0 : i32
    %c0_i32_1 = arith.constant 0 : i32
    return %c0_i32, %c0_i32_0 : i32, i32
  }
  func.func @transform_7(%arg0: i32) -> (i32, i32) {
    %c0_i32 = arith.constant 0 : i32
    %c0_i32_0 = arith.constant 0 : i32
    %c0_i32_1 = arith.constant 0 : i32
    return %c0_i32, %c0_i32_0 : i32, i32
  }
  func.func @transform_8(%arg0: i32) -> (i32, i32) {
    %c0_i32 = arith.constant 0 : i32
    %c0_i32_0 = arith.constant 0 : i32
    %c0_i32_1 = arith.constant 0 : i32
    return %c0_i32, %c0_i32_0 : i32, i32
  }
  func.func @transform_9(%arg0: i32) -> (i32, i32, i32) {
    %c0_i32 = arith.constant 0 : i32
    %c0_i32_0 = arith.constant 0 : i32
    %c0_i32_1 = arith.constant 0 : i32
    return %arg0, %c0_i32, %c0_i32_0 : i32, i32, i32
  }
  func.func @transform_10(%arg0: i32) -> (i32, i32, i32, i32) {
    %c0_i32 = arith.constant 0 : i32
    %c0_i32_0 = arith.constant 0 : i32
    %c0_i32_1 = arith.constant 0 : i32
    %c0_i32_2 = arith.constant 0 : i32
    return %c0_i32, %arg0, %c0_i32_0, %c0_i32_1 : i32, i32, i32, i32
  }
}

</mosaic_0001>

<llo_original>
// kernel: tpu_custom_call.1
$region0: #{tpu_custom_call.1}
  #allocation0 [shape = 'u32[]', space=smem, size = 0x4, offset = 0x4, fixed_abs, tag = 'smem constant byte address 0x4 - core index']
  #allocation1 [shape = 'u32[144,128]{1,0:T(1,128)}', space=vmem, size = 0x12000, scoped, tag = 'internal scratch']
  %s0 = inlined_call_operand.hbm [shape: f32[2,8,32], index: 0, kind: input, shape index: {}]
  %s1 = inlined_call_operand.hbm [shape: f32[2,8,32], index: 1, kind: input, shape index: {}]
  %s2 = inlined_call_operand.hbm [shape: f32[2,8,32], index: 2, kind: input, shape index: {}]
  %s3 = inlined_call_operand.hbm [shape: f32[32,32], index: 3, kind: input, shape index: {}]
  %s4 = inlined_call_operand.hbm [shape: f32[32,32], index: 4, kind: input, shape index: {}]
  %s5 = inlined_call_operand.hbm [shape: f32[32,32], index: 5, kind: input, shape index: {}]
  %s6 = inlined_call_operand.hbm [shape: f32[32,32], index: 6, kind: input, shape index: {}]
  %s7 = inlined_call_operand.vmem [shape: f32[1,32], index: 7, kind: input, shape index: {}]
  %s8 = inlined_call_operand.vmem [shape: f32[1,32], index: 8, kind: input, shape index: {}]
  %s9 = inlined_call_operand.hbm [shape: f32[2,8,32], index: 9, kind: output, shape index: {0}]
  %s10 = inlined_call_operand.hbm [shape: f32[4,2,8,8], index: 10, kind: output, shape index: {1}]
  %11 = xla_tuple %s9, %s10
  %s12 = sld [smem:[#allocation0]]
  $region105: #{tpu_custom_call.1} parent=0
    _
  %s14 = ssub.s32 1, %s12
  %s15 = scalar_select 0, %s14, %s12
  $region1: #{tpu_custom_call.1} parent=0
    #allocation2 [shape = 'u8[8192]{0}', space=vmem, size = 0x2000, scoped, tag = 'input window, operand 0']
    #allocation3 [shape = 's32[2]{0}', space=sflag, size = 0x8, scoped, tag = 'scoped memory for tpu_custom_call.1']
    #allocation4 [shape = 's32[2]{0}', space=sflag, size = 0x8, scoped, tag = 'scoped memory for tpu_custom_call.1']
    #allocation5 [shape = 'u8[8192]{0}', space=vmem, size = 0x2000, scoped, tag = 'input window, operand 1']
    #allocation6 [shape = 's32[2]{0}', space=sflag, size = 0x8, scoped, tag = 'scoped memory for tpu_custom_call.1']
    #allocation7 [shape = 'u8[8192]{0}', space=vmem, size = 0x2000, scoped, tag = 'input window, operand 2']
    #allocation8 [shape = 'u8[16384]{0}', space=vmem, size = 0x4000, scoped, tag = 'input window, operand 3, single buffered']
    #allocation9 [shape = 's32[1]{0}', space=sflag, size = 0x4, scoped, tag = 'scoped memory for tpu_custom_call.1']
    #allocation10 [shape = 'u8[16384]{0}', space=vmem, size = 0x4000, scoped, tag = 'input window, operand 4, single buffered']
    #allocation11 [shape = 'u8[16384]{0}', space=vmem, size = 0x4000, scoped, tag = 'input window, operand 5, single buffered']
    #allocation12 [shape = 's32[1]{0}', space=sflag, size = 0x4, scoped, tag = 'scoped memory for tpu_custom_call.1']
    #allocation13 [shape = 'u8[16384]{0}', space=vmem, size = 0x4000, scoped, tag = 'input window, operand 6, single buffered']
    #allocation14 [shape = 'u8[8192]{0}', space=vmem, size = 0x2000, scoped, tag = 'output window, operand 0']
    #allocation15 [shape = 'u8[32768]{0}', space=vmem, size = 0x8000, scoped, tag = 'output window, operand 1']
    #allocation16 [shape = 's32[2]{0}', space=sflag, size = 0x8, scoped, tag = 'scoped memory for tpu_custom_call.1']
    %16 = vsyncpa [#allocation3], 0
    %s17 = scalar_lea.sflag [#allocation3], 1
    %18 = vsyncpa %s17, 0
    %19 = vsyncpa [#allocation6], 0
    %s20 = scalar_lea.sflag [#allocation6], 1
    %21 = vsyncpa %s20, 0
    %22 = vsyncpa [#allocation9], 0
    %23 = vsyncpa [#allocation12], 0
    %24 = vsyncpa [#allocation4], 0
    %s25 = scalar_lea.sflag [#allocation4], 1
    %26 = vsyncpa %s25, 0
    %27 = vsyncpa [#allocation16], 0
    %s28 = scalar_lea.sflag [#allocation16], 1
    %29 = vsyncpa %s28, 0
    loop: start=0, step=1, limit=4
    $region2: #{tpu_custom_call.1} parent=1 // loop_pre_header
      _
    $region3: #{tpu_custom_call.1} parent=1 // loop_header
      %s31 = sphi 0, %s35
      %p32 = scmp.ge.s32.totalorder %s31, 4
      %s41 = sphi 0, %s43
      %s44 = sphi 0, %s41
      %s45 = sphi 0, %s44
      %s61 = sphi 0, %s45
      %s67 = sphi 0, %s69
      %s70 = sphi 0, %s67
      %s71 = sphi 0, %s70
      %s87 = sphi 0, %s71
      %s93 = sphi 0, %s95
      %s96 = sphi 0, %s93
      %s97 = sphi 0, %s96
      %s113 = sphi 0, %s97
      %s117 = sphi 0, %s117
      %s119 = sphi 0, %s117
      %s120 = sphi 0, %s119
      %s134 = sphi 0, %s120
      %s138 = sphi 0, %s138
      %s140 = sphi 0, %s138
      %s141 = sphi 0, %s140
      %s155 = sphi 0, %s141
      %s159 = sphi 0, %s159
      %s161 = sphi 0, %s159
      %s162 = sphi 0, %s161
      %s176 = sphi 0, %s162
      %s180 = sphi 0, %s180
      %s182 = sphi 0, %s180
      %s183 = sphi 0, %s182
      %s197 = sphi 0, %s183
      %s201 = sphi 0, %s201
      %s203 = sphi 0, %s201
      %s204 = sphi 0, %s203
      %s218 = sphi 0, %s204
      %s222 = sphi 0, %s222
      %s224 = sphi 0, %s222
      %s225 = sphi 0, %s224
      %s239 = sphi 0, %s225
      %s245 = sphi 0, %s247
      %s248 = sphi 0, %s245
      %s249 = sphi 0, %s248
      %s265 = sphi 0, %s249
      %s271 = sphi 0, %s273
      %s274 = sphi 0, %s271
      %s275 = sphi 0, %s274
      %s291 = sphi 0, %s275
    $region4: #{tpu_custom_call.1} parent=1 // loop_header_branch
      %34 = sbr.rel (%p32) target = $region8
    $region5: #{tpu_custom_call.1} parent=1 // loop_body
      %s36 = ssub.s32 %s31, 1
      %s37 = ssub.s32 %s31, 2
      %s38 = sadd.s32 %s31, 1
      %s39 = ssub.s32 %s31, %s38
      %p40 = scmp.eq.s32.totalorder %s39, 0
      %s42 = sadd.s32 %s41, 1
      %s43 = scalar_select %p40, %s41, %s42
      %p46 = pneg %p40
      %p47 = scmp.eq.s32.totalorder %s31, 1
      %p48 = por %p46, %p47
      %p49 = scmp.ne.s32.totalorder %s41, %s44
      %p50 = scmp.eq.s32.totalorder %s31, 0
      %p51 = por %p49, %p50
      %p52 = scmp.ne.s32.totalorder %s41, %s44
      %p53 = scmp.eq.s32.totalorder %s36, 1
      %p54 = por %p52, %p53
      %p55 = scmp.ne.s32.totalorder %s44, %s45
      %p56 = scmp.eq.s32.totalorder %s36, 0
      %p57 = por %p55, %p56
      %p58 = scmp.ne.s32.totalorder %s44, %s45
      %p59 = scmp.eq.s32.totalorder %s37, 1
      %p60 = por %p58, %p59
      %p62 = scmp.ne.s32.totalorder %s45, %s61
      %p63 = scmp.eq.s32.totalorder %s37, 0
      %p64 = por %p62, %p63
      %s65 = ssub.s32 %s31, %s38
      %p66 = scmp.eq.s32.totalorder %s65, 0
      %s68 = sadd.s32 %s67, 1
      %s69 = scalar_select %p66, %s67, %s68
      %p72 = pneg %p66
      %p73 = scmp.eq.s32.totalorder %s31, 1
      %p74 = por %p72, %p73
      %p75 = scmp.ne.s32.totalorder %s67, %s70
      %p76 = scmp.eq.s32.totalorder %s31, 0
      %p77 = por %p75, %p76
      %p78 = scmp.ne.s32.totalorder %s67, %s70
      %p79 = scmp.eq.s32.totalorder %s36, 1
      %p80 = por %p78, %p79
      %p81 = scmp.ne.s32.totalorder %s70, %s71
      %p82 = scmp.eq.s32.totalorder %s36, 0
      %p83 = por %p81, %p82
      %p84 = scmp.ne.s32.totalorder %s70, %s71
      %p85 = scmp.eq.s32.totalorder %s37, 1
      %p86 = por %p84, %p85
      %p88 = scmp.ne.s32.totalorder %s71, %s87
      %p89 = scmp.eq.s32.totalorder %s37, 0
      %p90 = por %p88, %p89
      %s91 = ssub.s32 %s31, %s38
      %p92 = scmp.eq.s32.totalorder %s91, 0
      %s94 = sadd.s32 %s93, 1
      %s95 = scalar_select %p92, %s93, %s94
      %p98 = pneg %p92
      %p99 = scmp.eq.s32.totalorder %s31, 1
      %p100 = por %p98, %p99
      %p101 = scmp.ne.s32.totalorder %s93, %s96
      %p102 = scmp.eq.s32.totalorder %s31, 0
      %p103 = por %p101, %p102
      %p104 = scmp.ne.s32.totalorder %s93, %s96
      %p105 = scmp.eq.s32.totalorder %s36, 1
      %p106 = por %p104, %p105
      %p107 = scmp.ne.s32.totalorder %s96, %s97
      %p108 = scmp.eq.s32.totalorder %s36, 0
      %p109 = por %p107, %p108
      %p110 = scmp.ne.s32.totalorder %s96, %s97
      %p111 = scmp.eq.s32.totalorder %s37, 1
      %p112 = por %p110, %p111
      %p114 = scmp.ne.s32.totalorder %s97, %s113
      %p115 = scmp.eq.s32.totalorder %s37, 0
      %p116 = por %p114, %p115
      %s118 = sadd.s32 %s117, 1
      %p121 = scmp.eq.s32.totalorder %s31, 1
      %p122 = scmp.ne.s32.totalorder %s117, %s119
      %p123 = scmp.eq.s32.totalorder %s31, 0
      %p124 = por %p122, %p123
      %p125 = scmp.ne.s32.totalorder %s117, %s119
      %p126 = scmp.eq.s32.totalorder %s36, 1
      %p127 = por %p125, %p126
      %p128 = scmp.ne.s32.totalorder %s119, %s120
      %p129 = scmp.eq.s32.totalorder %s36, 0
      %p130 = por %p128, %p129
      %p131 = scmp.ne.s32.totalorder %s119, %s120
      %p132 = scmp.eq.s32.totalorder %s37, 1
      %p133 = por %p131, %p132
      %p135 = scmp.ne.s32.totalorder %s120, %s134
      %p136 = scmp.eq.s32.totalorder %s37, 0
      %p137 = por %p135, %p136
      %s139 = sadd.s32 %s138, 1
      %p142 = scmp.eq.s32.totalorder %s31, 1
      %p143 = scmp.ne.s32.totalorder %s138, %s140
      %p144 = scmp.eq.s32.totalorder %s31, 0
      %p145 = por %p143, %p144
      %p146 = scmp.ne.s32.totalorder %s138, %s140
      %p147 = scmp.eq.s32.totalorder %s36, 1
      %p148 = por %p146, %p147
      %p149 = scmp.ne.s32.totalorder %s140, %s141
      %p150 = scmp.eq.s32.totalorder %s36, 0
      %p151 = por %p149, %p150
      %p152 = scmp.ne.s32.totalorder %s140, %s141
      %p153 = scmp.eq.s32.totalorder %s37, 1
      %p154 = por %p152, %p153
      %p156 = scmp.ne.s32.totalorder %s141, %s155
      %p157 = scmp.eq.s32.totalorder %s37, 0
      %p158 = por %p156, %p157
      %s160 = sadd.s32 %s159, 1
      %p163 = scmp.eq.s32.totalorder %s31, 1
      %p164 = scmp.ne.s32.totalorder %s159, %s161
      %p165 = scmp.eq.s32.totalorder %s31, 0
      %p166 = por %p164, %p165
      %p167 = scmp.ne.s32.totalorder %s159, %s161
      %p168 = scmp.eq.s32.totalorder %s36, 1
      %p169 = por %p167, %p168
      %p170 = scmp.ne.s32.totalorder %s161, %s162
      %p171 = scmp.eq.s32.totalorder %s36, 0
      %p172 = por %p170, %p171
      %p173 = scmp.ne.s32.totalorder %s161, %s162
      %p174 = scmp.eq.s32.totalorder %s37, 1
      %p175 = por %p173, %p174
      %p177 = scmp.ne.s32.totalorder %s162, %s176
      %p178 = scmp.eq.s32.totalorder %s37, 0
      %p179 = por %p177, %p178
      %s181 = sadd.s32 %s180, 1
      %p184 = scmp.eq.s32.totalorder %s31, 1
      %p185 = scmp.ne.s32.totalorder %s180, %s182
      %p186 = scmp.eq.s32.totalorder %s31, 0
      %p187 = por %p185, %p186
      %p188 = scmp.ne.s32.totalorder %s180, %s182
      %p189 = scmp.eq.s32.totalorder %s36, 1
      %p190 = por %p188, %p189
      %p191 = scmp.ne.s32.totalorder %s182, %s183
      %p192 = scmp.eq.s32.totalorder %s36, 0
      %p193 = por %p191, %p192
      %p194 = scmp.ne.s32.totalorder %s182, %s183
      %p195 = scmp.eq.s32.totalorder %s37, 1
      %p196 = por %p194, %p195
      %p198 = scmp.ne.s32.totalorder %s183, %s197
      %p199 = scmp.eq.s32.totalorder %s37, 0
      %p200 = por %p198, %p199
      %s202 = sadd.s32 %s201, 1
      %p205 = scmp.eq.s32.totalorder %s31, 1
      %p206 = scmp.ne.s32.totalorder %s201, %s203
      %p207 = scmp.eq.s32.totalorder %s31, 0
      %p208 = por %p206, %p207
      %p209 = scmp.ne.s32.totalorder %s201, %s203
      %p210 = scmp.eq.s32.totalorder %s36, 1
      %p211 = por %p209, %p210
      %p212 = scmp.ne.s32.totalorder %s203, %s204
      %p213 = scmp.eq.s32.totalorder %s36, 0
      %p214 = por %p212, %p213
      %p215 = scmp.ne.s32.totalorder %s203, %s204
      %p216 = scmp.eq.s32.totalorder %s37, 1
      %p217 = por %p215, %p216
      %p219 = scmp.ne.s32.totalorder %s204, %s218
      %p220 = scmp.eq.s32.totalorder %s37, 0
      %p221 = por %p219, %p220
      %s223 = sadd.s32 %s222, 1
      %p226 = scmp.eq.s32.totalorder %s31, 1
      %p227 = scmp.ne.s32.totalorder %s222, %s224
      %p228 = scmp.eq.s32.totalorder %s31, 0
      %p229 = por %p227, %p228
      %p230 = scmp.ne.s32.totalorder %s222, %s224
      %p231 = scmp.eq.s32.totalorder %s36, 1
      %p232 = por %p230, %p231
      %p233 = scmp.ne.s32.totalorder %s224, %s225
      %p234 = scmp.eq.s32.totalorder %s36, 0
      %p235 = por %p233, %p234
      %p236 = scmp.ne.s32.totalorder %s224, %s225
      %p237 = scmp.eq.s32.totalorder %s37, 1
      %p238 = por %p236, %p237
      %p240 = scmp.ne.s32.totalorder %s225, %s239
      %p241 = scmp.eq.s32.totalorder %s37, 0
      %p242 = por %p240, %p241
      %s243 = ssub.s32 %s31, %s38
      %p244 = scmp.eq.s32.totalorder %s243, 0
      %s246 = sadd.s32 %s245, 1
      %s247 = scalar_select %p244, %s245, %s246
      %p250 = pneg %p244
      %p251 = scmp.eq.s32.totalorder %s31, 1
      %p252 = por %p250, %p251
      %p253 = scmp.ne.s32.totalorder %s245, %s248
      %p254 = scmp.eq.s32.totalorder %s31, 0
      %p255 = por %p253, %p254
      %p256 = scmp.ne.s32.totalorder %s245, %s248
      %p257 = scmp.eq.s32.totalorder %s36, 1
      %p258 = por %p256, %p257
      %p259 = scmp.ne.s32.totalorder %s248, %s249
      %p260 = scmp.eq.s32.totalorder %s36, 0
      %p261 = por %p259, %p260
      %p262 = scmp.ne.s32.totalorder %s248, %s249
      %p263 = scmp.eq.s32.totalorder %s37, 1
      %p264 = por %p262, %p263
      %p266 = scmp.ne.s32.totalorder %s249, %s265
      %p267 = scmp.eq.s32.totalorder %s37, 0
      %p268 = por %p266, %p267
      %s269 = ssub.s32 %s31, %s38
      %p270 = scmp.eq.s32.totalorder %s269, 0
      %s272 = sadd.s32 %s271, 1
      %s273 = scalar_select %p270, %s271, %s272
      %p276 = pneg %p270
      %p277 = scmp.eq.s32.totalorder %s31, 1
      %p278 = por %p276, %p277
      %p279 = scmp.ne.s32.totalorder %s271, %s274
      %p280 = scmp.eq.s32.totalorder %s31, 0
      %p281 = por %p279, %p280
      %p282 = scmp.ne.s32.totalorder %s271, %s274
      %p283 = scmp.eq.s32.totalorder %s36, 1
      %p284 = por %p282, %p283
      %p285 = scmp.ne.s32.totalorder %s274, %s275
      %p286 = scmp.eq.s32.totalorder %s36, 0
      %p287 = por %p285, %p286
      %p288 = scmp.ne.s32.totalorder %s274, %s275
      %p289 = scmp.eq.s32.totalorder %s37, 1
      %p290 = por %p288, %p289
      %p292 = scmp.ne.s32.totalorder %s275, %s291
      %p293 = scmp.eq.s32.totalorder %s37, 0
      %p294 = por %p292, %p293
      %p295 = scmp.le.s32.totalorder 1, %s31
      %p296 = scmp.lt.s32.totalorder %s31, 3
      %p297 = pnand %p295, %p296
      %p298 = pneg %p297
      // Predicated region
      $region9: #{tpu_custom_call.1} parent=5 // pred_check
        _
      $region10: #{tpu_custom_call.1} parent=5 // pred_check_branch
        %300 = sbr.rel (%p297) target = $region12
      $region11: #{tpu_custom_call.1} parent=5 // pred_region
        %s301 = ssub.s32 %s31, 1
        // Predicated region
        $region13: #{tpu_custom_call.1} parent=11 // pred_check
          %p302 = pneg %p130
        $region14: #{tpu_custom_call.1} parent=11 // pred_check_branch
          %304 = sbr.rel (%p302) target = $region16
        $region15: #{tpu_custom_call.1} parent=11 // pred_region
          %s306 = ssub.s32 512, 512
          %307 = vsyncadd [#allocation9], %s306
          %s308 = sshll.u32 [#allocation8], 4
          %s309 = int_to_ptr.vmem [resolvable:$true] %s308
          %314 = dma.hbm_to_vmem [thread:$0]  %s3, 512, %s309, [#allocation9], 128, 128, 8
        $region16: #{tpu_custom_call.1} parent=11 // pred_fallthru
          _
        // Predicated region
        $region17: #{tpu_custom_call.1} parent=11 // pred_check
          %p315 = pneg %p151
        $region18: #{tpu_custom_call.1} parent=11 // pred_check_branch
          %317 = sbr.rel (%p315) target = $region20
        $region19: #{tpu_custom_call.1} parent=11 // pred_region
          %s319 = ssub.s32 512, 512
          %320 = vsyncadd [#allocation9], %s319
          %s321 = sshll.u32 [#allocation10], 4
          %s322 = int_to_ptr.vmem [resolvable:$true] %s321
          %327 = dma.hbm_to_vmem [thread:$0]  %s4, 512, %s322, [#allocation9], 128, 128, 8
        $region20: #{tpu_custom_call.1} parent=11 // pred_fallthru
          _
        // Predicated region
        $region21: #{tpu_custom_call.1} parent=11 // pred_check
          %p328 = pneg %p172
        $region22: #{tpu_custom_call.1} parent=11 // pred_check_branch
          %330 = sbr.rel (%p328) target = $region24
        $region23: #{tpu_custom_call.1} parent=11 // pred_region
          %s332 = ssub.s32 512, 512
          %333 = vsyncadd [#allocation12], %s332
          %s334 = sshll.u32 [#allocation11], 4
          %s335 = int_to_ptr.vmem [resolvable:$true] %s334
          %340 = dma.hbm_to_vmem [thread:$0]  %s5, 512, %s335, [#allocation12], 128, 128, 8
        $region24: #{tpu_custom_call.1} parent=11 // pred_fallthru
          _
        // Predicated region
        $region25: #{tpu_custom_call.1} parent=11 // pred_check
          %p341 = pneg %p193
        $region26: #{tpu_custom_call.1} parent=11 // pred_check_branch
          %343 = sbr.rel (%p341) target = $region28
        $region27: #{tpu_custom_call.1} parent=11 // pred_region
          %s345 = ssub.s32 512, 512
          %346 = vsyncadd [#allocation12], %s345
          %s347 = sshll.u32 [#allocation13], 4
          %s348 = int_to_ptr.vmem [resolvable:$true] %s347
          %353 = dma.hbm_to_vmem [thread:$0]  %s6, 512, %s348, [#allocation12], 128, 128, 8
        $region28: #{tpu_custom_call.1} parent=11 // pred_fallthru
          _
        // Predicated region
        $region29: #{tpu_custom_call.1} parent=11 // pred_check
          %p354 = pneg %p214
        $region30: #{tpu_custom_call.1} parent=11 // pred_check_branch
          %356 = sbr.rel (%p354) target = $region32
        $region31: #{tpu_custom_call.1} parent=11 // pred_region
          _
        $region32: #{tpu_custom_call.1} parent=11 // pred_fallthru
          _
        // Predicated region
        $region33: #{tpu_custom_call.1} parent=11 // pred_check
          %p357 = pneg %p235
        $region34: #{tpu_custom_call.1} parent=11 // pred_check_branch
          %359 = sbr.rel (%p357) target = $region36
        $region35: #{tpu_custom_call.1} parent=11 // pred_region
          _
        $region36: #{tpu_custom_call.1} parent=11 // pred_fallthru
          _
      $region12: #{tpu_custom_call.1} parent=5 // pred_fallthru
        _
      %p360 = scmp.lt.s32.totalorder %s31, 2
      // Predicated region
      $region37: #{tpu_custom_call.1} parent=5 // pred_check
        %p361 = pneg %p360
      $region38: #{tpu_custom_call.1} parent=5 // pred_check_branch
        %363 = sbr.rel (%p361) target = $region40
      $region39: #{tpu_custom_call.1} parent=5 // pred_region
        // Predicated region
        $region41: #{tpu_custom_call.1} parent=39 // pred_check
          %p364 = pneg %p51
        $region42: #{tpu_custom_call.1} parent=39 // pred_check_branch
          %366 = sbr.rel (%p364) target = $region44
        $region43: #{tpu_custom_call.1} parent=39 // pred_region
          %s367 = sand.u32 %s41, 1
          %s368 = scalar_lea.sflag [#allocation3], %s367
          %s369 = sand.u32 %s41, 1
          %s370 = smul.addr %s369, 8
          %s371 = scalar_lea.vmem [#allocation2], %s370
          %s373 = ssub.s32 128, 128
          %374 = vsyncadd %s368, %s373
          %s375 = smul.addr %s31, 128
          %s376 = scalar_lea.hbm %s0, %s375
          %s378 = sshll.u32 %s371, 4
          %s379 = int_to_ptr.vmem [resolvable:$true] %s378
          %381 = dma.hbm_to_vmem [thread:$0]  %s376, 128, %s379, %s368
        $region44: #{tpu_custom_call.1} parent=39 // pred_fallthru
          _
        // Predicated region
        $region45: #{tpu_custom_call.1} parent=39 // pred_check
          %p382 = pneg %p77
        $region46: #{tpu_custom_call.1} parent=39 // pred_check_branch
          %384 = sbr.rel (%p382) target = $region48
        $region47: #{tpu_custom_call.1} parent=39 // pred_region
          %s385 = sand.u32 %s31, 1
          %s386 = scalar_lea.sflag [#allocation6], %s385
          %s387 = sand.u32 %s67, 1
          %s388 = smul.addr %s387, 8
          %s389 = scalar_lea.vmem [#allocation5], %s388
          %s391 = ssub.s32 128, 128
          %392 = vsyncadd %s386, %s391
          %s393 = smul.addr %s31, 128
          %s394 = scalar_lea.hbm %s1, %s393
          %s396 = sshll.u32 %s389, 4
          %s397 = int_to_ptr.vmem [resolvable:$true] %s396
          %399 = dma.hbm_to_vmem [thread:$0]  %s394, 128, %s397, %s386
        $region48: #{tpu_custom_call.1} parent=39 // pred_fallthru
          _
        // Predicated region
        $region49: #{tpu_custom_call.1} parent=39 // pred_check
          %p400 = pneg %p103
        $region50: #{tpu_custom_call.1} parent=39 // pred_check_branch
          %402 = sbr.rel (%p400) target = $region52
        $region51: #{tpu_custom_call.1} parent=39 // pred_region
          %s403 = sand.u32 %s31, 1
          %s404 = scalar_lea.sflag [#allocation6], %s403
          %s405 = sand.u32 %s93, 1
          %s406 = smul.addr %s405, 8
          %s407 = scalar_lea.vmem [#allocation7], %s406
          %s409 = ssub.s32 128, 128
          %410 = vsyncadd %s404, %s409
          %s411 = smul.addr %s31, 128
          %s412 = scalar_lea.hbm %s2, %s411
          %s414 = sshll.u32 %s407, 4
          %s415 = int_to_ptr.vmem [resolvable:$true] %s414
          %417 = dma.hbm_to_vmem [thread:$0]  %s412, 128, %s415, %s404
        $region52: #{tpu_custom_call.1} parent=39 // pred_fallthru
          _
      $region40: #{tpu_custom_call.1} parent=5 // pred_fallthru
        _
      %p418 = scmp.le.s32.totalorder 1, %s31
      %p419 = scmp.lt.s32.totalorder %s31, 3
      %p420 = pnand %p418, %p419
      %p421 = pneg %p420
      // Predicated region
      $region53: #{tpu_custom_call.1} parent=5 // pred_check
        _
      $region54: #{tpu_custom_call.1} parent=5 // pred_check_branch
        %423 = sbr.rel (%p420) target = $region56
      $region55: #{tpu_custom_call.1} parent=5 // pred_region
        %s424 = ssub.s32 %s31, 1
        %s425 = sand.u32 %s44, 1
        %s426 = scalar_lea.sflag [#allocation3], %s425
        %s427 = sand.u32 %s44, 1
        %s428 = smul.addr %s427, 8
        %s429 = scalar_lea.vmem [#allocation2], %s428
        // Predicated region
        $region57: #{tpu_custom_call.1} parent=55 // pred_check
          %p430 = pneg %p57
        $region58: #{tpu_custom_call.1} parent=55 // pred_check_branch
          %432 = sbr.rel (%p430) target = $region60
        $region59: #{tpu_custom_call.1} parent=55 // pred_region
          %433 = dma.done %s426, 128
        $region60: #{tpu_custom_call.1} parent=55 // pred_fallthru
          _
        %s434 = sand.u32 %s36, 1
        %s435 = scalar_lea.sflag [#allocation6], %s434
        %s436 = sand.u32 %s70, 1
        %s437 = smul.addr %s436, 8
        %s438 = scalar_lea.vmem [#allocation5], %s437
        // Predicated region
        $region61: #{tpu_custom_call.1} parent=55 // pred_check
          %p439 = pneg %p83
        $region62: #{tpu_custom_call.1} parent=55 // pred_check_branch
          %441 = sbr.rel (%p439) target = $region64
        $region63: #{tpu_custom_call.1} parent=55 // pred_region
          %442 = dma.done %s435, 128
        $region64: #{tpu_custom_call.1} parent=55 // pred_fallthru
          _
        %s443 = sand.u32 %s36, 1
        %s444 = scalar_lea.sflag [#allocation6], %s443
        %s445 = sand.u32 %s96, 1
        %s446 = smul.addr %s445, 8
        %s447 = scalar_lea.vmem [#allocation7], %s446
        // Predicated region
        $region65: #{tpu_custom_call.1} parent=55 // pred_check
          %p448 = pneg %p109
        $region66: #{tpu_custom_call.1} parent=55 // pred_check_branch
          %450 = sbr.rel (%p448) target = $region68
        $region67: #{tpu_custom_call.1} parent=55 // pred_region
          %451 = dma.done %s444, 128
        $region68: #{tpu_custom_call.1} parent=55 // pred_fallthru
          _
        // Predicated region
        $region69: #{tpu_custom_call.1} parent=55 // pred_check
          %p452 = pneg %p130
        $region70: #{tpu_custom_call.1} parent=55 // pred_check_branch
          %454 = sbr.rel (%p452) target = $region72
        $region71: #{tpu_custom_call.1} parent=55 // pred_region
          %455 = dma.done [#allocation9], 512
        $region72: #{tpu_custom_call.1} parent=55 // pred_fallthru
          _
        // Predicated region
        $region73: #{tpu_custom_call.1} parent=55 // pred_check
          %p456 = pneg %p151
        $region74: #{tpu_custom_call.1} parent=55 // pred_check_branch
          %458 = sbr.rel (%p456) target = $region76
        $region75: #{tpu_custom_call.1} parent=55 // pred_region
          %459 = dma.done [#allocation9], 512
        $region76: #{tpu_custom_call.1} parent=55 // pred_fallthru
          _
        // Predicated region
        $region77: #{tpu_custom_call.1} parent=55 // pred_check
          %p460 = pneg %p172
        $region78: #{tpu_custom_call.1} parent=55 // pred_check_branch
          %462 = sbr.rel (%p460) target = $region80
        $region79: #{tpu_custom_call.1} parent=55 // pred_region
          %463 = dma.done [#allocation12], 512
        $region80: #{tpu_custom_call.1} parent=55 // pred_fallthru
          _
        // Predicated region
        $region81: #{tpu_custom_call.1} parent=55 // pred_check
          %p464 = pneg %p193
        $region82: #{tpu_custom_call.1} parent=55 // pred_check_branch
          %466 = sbr.rel (%p464) target = $region84
        $region83: #{tpu_custom_call.1} parent=55 // pred_region
          %467 = dma.done [#allocation12], 512
        $region84: #{tpu_custom_call.1} parent=55 // pred_fallthru
          _
        %s468 = sand.u32 %s44, 1
        %s469 = scalar_lea.sflag [#allocation3], %s468
        %s470 = sand.u32 %s44, 1
        %s471 = smul.addr %s470, 8
        %s472 = scalar_lea.vmem [#allocation2], %s471
        %p473 = pneg %p57
        %p474 = pneg %p54
        %s475 = sand.u32 %s36, 1
        %s476 = scalar_lea.sflag [#allocation6], %s475
        %s477 = sand.u32 %s70, 1
        %s478 = smul.addr %s477, 8
        %s479 = scalar_lea.vmem [#allocation5], %s478
        %p480 = pneg %p83
        %p481 = pneg %p80
        %s482 = sand.u32 %s36, 1
        %s483 = scalar_lea.sflag [#allocation6], %s482
        %s484 = sand.u32 %s96, 1
        %s485 = smul.addr %s484, 8
        %s486 = scalar_lea.vmem [#allocation7], %s485
        %p487 = pneg %p109
        %p488 = pneg %p106
        %p489 = pneg %p130
        %p490 = pneg %p127
        %p491 = pneg %p151
        %p492 = pneg %p148
        %p493 = pneg %p172
        %p494 = pneg %p169
        %p495 = pneg %p193
        %p496 = pneg %p190
        %p497 = pneg %p214
        %p498 = pneg %p211
        %p499 = pneg %p235
        %p500 = pneg %p232
        %p501 = pneg %p261
        %p502 = pneg %p258
        %s503 = sand.u32 %s248, 1
        %s504 = scalar_lea.sflag [#allocation4], %s503
        %s505 = sand.u32 %s248, 1
        %s506 = smul.addr %s505, 8
        %s507 = scalar_lea.vmem [#allocation14], %s506
        %p508 = pneg %p287
        %p509 = pneg %p284
        %s510 = sand.u32 %s274, 1
        %s511 = scalar_lea.sflag [#allocation16], %s510
        %s512 = sand.u32 %s274, 1
        %s513 = smul.addr %s512, 32
        %s514 = scalar_lea.vmem [#allocation15], %s513
        %v515 = vld [vmem:[%s429] sm:$0xff]
        %v516 = vld [vmem:[%s438] sm:$0xff]
        %v517 = vld [vmem:[%s447] sm:$0xff]
        %v518 = vld [vmem:[#allocation8] sm:$0xff]
        %v519 = vld [vmem:[#allocation8 + $0x8] sm:$0xff]
        %v520 = vld [vmem:[#allocation8 + $0x10] sm:$0xff]
        %v521 = vld [vmem:[#allocation8 + $0x18] sm:$0xff]
        %vm522 = vcmask 261120
        %v524 = vsel %vm522, %v515, 0
        %526 = vmatprep.subr.mxu0 0.0
        %527 = vmatpush1.msra.mxu0 0.0
        %528 = vmatprep.subr.mxu0 0.0
        %529 = vmatpush1.msra.mxu0 0.0
        %530 = vmatprep.subr.mxu0 0.0
        %531 = vmatpush1.msra.mxu0 0.0
        %532 = vmatprep.subr.mxu0 0.0
        %533 = vmatpush1.msra.mxu0 0.0
        %534 = vmatprep.subr.mxu0 0.0
        %535 = vmatpush1.msra.mxu0 0.0
        %536 = vmatprep.subr.mxu0 0.0
        %537 = vmatpush1.msra.mxu0 0.0
        %538 = vmatprep.subr.mxu0 0.0
        %539 = vmatpush1.msra.mxu0 0.0
        %540 = vmatprep.subr.mxu0 0.0
        %541 = vmatpush1.msra.mxu0 0.0
        %542 = vmatprep.subr.mxu0 0.0
        %543 = vmatpush1.msra.mxu0 0.0
        %544 = vmatprep.subr.mxu0 0.0
        %545 = vmatpush1.msra.mxu0 0.0
        %546 = vmatprep.subr.mxu0 0.0
        %547 = vmatpush1.msra.mxu0 0.0
        %548 = vmatprep.subr.mxu0 0.0
        %549 = vmatpush1.msra.mxu0 0.0
        %550 = vmatprep.subr.mxu0 0.0
        %551 = vmatpush1.msra.mxu0 %v521
        %552 = vmatprep.subr.mxu0 0.0
        %553 = vmatpush1.msra.mxu0 %v520
        %554 = vmatprep.subr.mxu0 0.0
        %555 = vmatpush1.msra.mxu0 %v519
        %556 = vmatprep.subr.mxu0 0.0
        %557 = vmatpush1.msra.mxu0 %v518
        %558 = vmatprep.subr.mxu0 0.0
        %559 = vmatpush2.msra.mxu0 0.0
        %560 = vmatprep.subr.mxu0 0.0
        %561 = vmatpush2.msra.mxu0 0.0
        %562 = vmatprep.subr.mxu0 0.0
        %563 = vmatpush2.msra.mxu0 0.0
        %564 = vmatprep.subr.mxu0 0.0
        %565 = vmatpush2.msra.mxu0 0.0
        %566 = vmatprep.subr.mxu0 0.0
        %567 = vmatpush2.msra.mxu0 0.0
        %568 = vmatprep.subr.mxu0 0.0
        %569 = vmatpush2.msra.mxu0 0.0
        %570 = vmatprep.subr.mxu0 0.0
        %571 = vmatpush2.msra.mxu0 0.0
        %572 = vmatprep.subr.mxu0 0.0
        %573 = vmatpush2.msra.mxu0 0.0
        %574 = vmatprep.subr.mxu0 0.0
        %575 = vmatpush2.msra.mxu0 0.0
        %576 = vmatprep.subr.mxu0 0.0
        %577 = vmatpush2.msra.mxu0 0.0
        %578 = vmatprep.subr.mxu0 0.0
        %579 = vmatpush2.msra.mxu0 0.0
        %580 = vmatprep.subr.mxu0 0.0
        %581 = vmatpush2.msra.mxu0 0.0
        %582 = vmatprep.subr.mxu0 0.0
        %583 = vmatpush2.msra.mxu0 0.0
        %584 = vmatprep.subr.mxu0 0.0
        %585 = vmatpush2.msra.mxu0 0.0
        %586 = vmatprep.subr.mxu0 0.0
        %587 = vmatpush2.msra.mxu0 0.0
        %588 = vmatprep.subr.mxu0 0.0
        %589 = vmatpush2.msra.mxu0 0.0
        %590 = vmatprep.mubr.f32.mxu0 0.0
        %591 = vmatmul.mubr.f32.gmra.mxu0 %v524
        %v592 = vpop.f32.mrf.mxu0
        %v593 = vadd.f32 0.0, %v592
        %v594 = vpop.f32.mrf.mxu0
        %595 = vdwg.mxu0
        %v596 = vld [vmem:[#allocation10] sm:$0xff]
        %v597 = vld [vmem:[#allocation10 + $0x8] sm:$0xff]
        %v598 = vld [vmem:[#allocation10 + $0x10] sm:$0xff]
        %v599 = vld [vmem:[#allocation10 + $0x18] sm:$0xff]
        %v601 = vsel %vm522, %v516, 0
        %603 = vmatprep.subr.mxu0 0.0
        %604 = vmatpush1.msra.mxu0 0.0
        %605 = vmatprep.subr.mxu0 0.0
        %606 = vmatpush1.msra.mxu0 0.0
        %607 = vmatprep.subr.mxu0 0.0
        %608 = vmatpush1.msra.mxu0 0.0
        %609 = vmatprep.subr.mxu0 0.0
        %610 = vmatpush1.msra.mxu0 0.0
        %611 = vmatprep.subr.mxu0 0.0
        %612 = vmatpush1.msra.mxu0 0.0
        %613 = vmatprep.subr.mxu0 0.0
        %614 = vmatpush1.msra.mxu0 0.0
        %615 = vmatprep.subr.mxu0 0.0
        %616 = vmatpush1.msra.mxu0 0.0
        %617 = vmatprep.subr.mxu0 0.0
        %618 = vmatpush1.msra.mxu0 0.0
        %619 = vmatprep.subr.mxu0 0.0
        %620 = vmatpush1.msra.mxu0 0.0
        %621 = vmatprep.subr.mxu0 0.0
        %622 = vmatpush1.msra.mxu0 0.0
        %623 = vmatprep.subr.mxu0 0.0
        %624 = vmatpush1.msra.mxu0 0.0
        %625 = vmatprep.subr.mxu0 0.0
        %626 = vmatpush1.msra.mxu0 0.0
        %627 = vmatprep.subr.mxu0 0.0
        %628 = vmatpush1.msra.mxu0 %v599
        %629 = vmatprep.subr.mxu0 0.0
        %630 = vmatpush1.msra.mxu0 %v598
        %631 = vmatprep.subr.mxu0 0.0
        %632 = vmatpush1.msra.mxu0 %v597
        %633 = vmatprep.subr.mxu0 0.0
        %634 = vmatpush1.msra.mxu0 %v596
        %635 = vmatprep.subr.mxu0 0.0
        %636 = vmatpush2.msra.mxu0 0.0
        %637 = vmatprep.subr.mxu0 0.0
        %638 = vmatpush2.msra.mxu0 0.0
        %639 = vmatprep.subr.mxu0 0.0
        %640 = vmatpush2.msra.mxu0 0.0
        %641 = vmatprep.subr.mxu0 0.0
        %642 = vmatpush2.msra.mxu0 0.0
        %643 = vmatprep.subr.mxu0 0.0
        %644 = vmatpush2.msra.mxu0 0.0
        %645 = vmatprep.subr.mxu0 0.0
        %646 = vmatpush2.msra.mxu0 0.0
        %647 = vmatprep.subr.mxu0 0.0
        %648 = vmatpush2.msra.mxu0 0.0
        %649 = vmatprep.subr.mxu0 0.0
        %650 = vmatpush2.msra.mxu0 0.0
        %651 = vmatprep.subr.mxu0 0.0
        %652 = vmatpush2.msra.mxu0 0.0
        %653 = vmatprep.subr.mxu0 0.0
        %654 = vmatpush2.msra.mxu0 0.0
        %655 = vmatprep.subr.mxu0 0.0
        %656 = vmatpush2.msra.mxu0 0.0
        %657 = vmatprep.subr.mxu0 0.0
        %658 = vmatpush2.msra.mxu0 0.0
        %659 = vmatprep.subr.mxu0 0.0
        %660 = vmatpush2.msra.mxu0 0.0
        %661 = vmatprep.subr.mxu0 0.0
        %662 = vmatpush2.msra.mxu0 0.0
        %663 = vmatprep.subr.mxu0 0.0
        %664 = vmatpush2.msra.mxu0 0.0
        %665 = vmatprep.subr.mxu0 0.0
        %666 = vmatpush2.msra.mxu0 0.0
        %667 = vmatprep.mubr.f32.mxu0 0.0
        %668 = vmatmul.mubr.f32.gmra.mxu0 %v601
        %v669 = vpop.f32.mrf.mxu0
        %v670 = vadd.f32 0.0, %v669
        %v671 = vpop.f32.mrf.mxu0
        %672 = vdwg.mxu0
        %v673 = vld [vmem:[#allocation11] sm:$0xff]
        %v674 = vld [vmem:[#allocation11 + $0x8] sm:$0xff]
        %v675 = vld [vmem:[#allocation11 + $0x10] sm:$0xff]
        %v676 = vld [vmem:[#allocation11 + $0x18] sm:$0xff]
        %v678 = vsel %vm522, %v517, 0
        %680 = vmatprep.subr.mxu0 0.0
        %681 = vmatpush1.msra.mxu0 0.0
        %682 = vmatprep.subr.mxu0 0.0
        %683 = vmatpush1.msra.mxu0 0.0
        %684 = vmatprep.subr.mxu0 0.0
        %685 = vmatpush1.msra.mxu0 0.0
        %686 = vmatprep.subr.mxu0 0.0
        %687 = vmatpush1.msra.mxu0 0.0
        %688 = vmatprep.subr.mxu0 0.0
        %689 = vmatpush1.msra.mxu0 0.0
        %690 = vmatprep.subr.mxu0 0.0
        %691 = vmatpush1.msra.mxu0 0.0
        %692 = vmatprep.subr.mxu0 0.0
        %693 = vmatpush1.msra.mxu0 0.0
        %694 = vmatprep.subr.mxu0 0.0
        %695 = vmatpush1.msra.mxu0 0.0
        %696 = vmatprep.subr.mxu0 0.0
        %697 = vmatpush1.msra.mxu0 0.0
        %698 = vmatprep.subr.mxu0 0.0
        %699 = vmatpush1.msra.mxu0 0.0
        %700 = vmatprep.subr.mxu0 0.0
        %701 = vmatpush1.msra.mxu0 0.0
        %702 = vmatprep.subr.mxu0 0.0
        %703 = vmatpush1.msra.mxu0 0.0
        %704 = vmatprep.subr.mxu0 0.0
        %705 = vmatpush1.msra.mxu0 %v676
        %706 = vmatprep.subr.mxu0 0.0
        %707 = vmatpush1.msra.mxu0 %v675
        %708 = vmatprep.subr.mxu0 0.0
        %709 = vmatpush1.msra.mxu0 %v674
        %710 = vmatprep.subr.mxu0 0.0
        %711 = vmatpush1.msra.mxu0 %v673
        %712 = vmatprep.subr.mxu0 0.0
        %713 = vmatpush2.msra.mxu0 0.0
        %714 = vmatprep.subr.mxu0 0.0
        %715 = vmatpush2.msra.mxu0 0.0
        %716 = vmatprep.subr.mxu0 0.0
        %717 = vmatpush2.msra.mxu0 0.0
        %718 = vmatprep.subr.mxu0 0.0
        %719 = vmatpush2.msra.mxu0 0.0
        %720 = vmatprep.subr.mxu0 0.0
        %721 = vmatpush2.msra.mxu0 0.0
        %722 = vmatprep.subr.mxu0 0.0
        %723 = vmatpush2.msra.mxu0 0.0
        %724 = vmatprep.subr.mxu0 0.0
        %725 = vmatpush2.msra.mxu0 0.0
        %726 = vmatprep.subr.mxu0 0.0
        %727 = vmatpush2.msra.mxu0 0.0
        %728 = vmatprep.subr.mxu0 0.0
        %729 = vmatpush2.msra.mxu0 0.0
        %730 = vmatprep.subr.mxu0 0.0
        %731 = vmatpush2.msra.mxu0 0.0
        %732 = vmatprep.subr.mxu0 0.0
        %733 = vmatpush2.msra.mxu0 0.0
        %734 = vmatprep.subr.mxu0 0.0
        %735 = vmatpush2.msra.mxu0 0.0
        %736 = vmatprep.subr.mxu0 0.0
        %737 = vmatpush2.msra.mxu0 0.0
        %738 = vmatprep.subr.mxu0 0.0
        %739 = vmatpush2.msra.mxu0 0.0
        %740 = vmatprep.subr.mxu0 0.0
        %741 = vmatpush2.msra.mxu0 0.0
        %742 = vmatprep.subr.mxu0 0.0
        %743 = vmatpush2.msra.mxu0 0.0
        %744 = vmatprep.mubr.f32.mxu0 0.0
        %745 = vmatmul.mubr.f32.gmra.mxu0 %v678
        %v746 = vpop.f32.mrf.mxu0
        %v747 = vadd.f32 0.0, %v746
        %v748 = vpop.f32.mrf.mxu0
        %749 = vdwg.mxu0
        %vm750 = vcmask 64512
        %v752 = vsel %vm750, %v593, 0
        %v755 = vsel %vm750, %v670, 0
        %757 = vmatprep.subr.mxu0 0.0
        %758 = vmatpush1.xpose.msra.mxu0 0.0
        %759 = vmatprep.subr.mxu0 0.0
        %760 = vmatpush1.xpose.msra.mxu0 0.0
        %761 = vmatprep.subr.mxu0 0.0
        %762 = vmatpush1.xpose.msra.mxu0 0.0
        %763 = vmatprep.subr.mxu0 0.0
        %764 = vmatpush1.xpose.msra.mxu0 0.0
        %765 = vmatprep.subr.mxu0 0.0
        %766 = vmatpush1.xpose.msra.mxu0 0.0
        %767 = vmatprep.subr.mxu0 0.0
        %768 = vmatpush1.xpose.msra.mxu0 0.0
        %769 = vmatprep.subr.mxu0 0.0
        %770 = vmatpush1.xpose.msra.mxu0 0.0
        %771 = vmatprep.subr.mxu0 0.0
        %772 = vmatpush1.xpose.msra.mxu0 0.0
        %773 = vmatprep.subr.mxu0 0.0
        %774 = vmatpush1.xpose.msra.mxu0 0.0
        %775 = vmatprep.subr.mxu0 0.0
        %776 = vmatpush1.xpose.msra.mxu0 0.0
        %777 = vmatprep.subr.mxu0 0.0
        %778 = vmatpush1.xpose.msra.mxu0 0.0
        %779 = vmatprep.subr.mxu0 0.0
        %780 = vmatpush1.xpose.msra.mxu0 0.0
        %781 = vmatprep.subr.mxu0 0.0
        %782 = vmatpush1.xpose.msra.mxu0 0.0
        %783 = vmatprep.subr.mxu0 0.0
        %784 = vmatpush1.xpose.msra.mxu0 0.0
        %785 = vmatprep.subr.mxu0 0.0
        %786 = vmatpush1.xpose.msra.mxu0 0.0
        %787 = vmatprep.subr.mxu0 0.0
        %788 = vmatpush1.xpose.msra.mxu0 %v755
        %789 = vmatprep.subr.mxu0 0.0
        %790 = vmatpush2.xpose.msra.mxu0 0.0
        %791 = vmatprep.subr.mxu0 0.0
        %792 = vmatpush2.xpose.msra.mxu0 0.0
        %793 = vmatprep.subr.mxu0 0.0
        %794 = vmatpush2.xpose.msra.mxu0 0.0
        %795 = vmatprep.subr.mxu0 0.0
        %796 = vmatpush2.xpose.msra.mxu0 0.0
        %797 = vmatprep.subr.mxu0 0.0
        %798 = vmatpush2.xpose.msra.mxu0 0.0
        %799 = vmatprep.subr.mxu0 0.0
        %800 = vmatpush2.xpose.msra.mxu0 0.0
        %801 = vmatprep.subr.mxu0 0.0
        %802 = vmatpush2.xpose.msra.mxu0 0.0
        %803 = vmatprep.subr.mxu0 0.0
        %804 = vmatpush2.xpose.msra.mxu0 0.0
        %805 = vmatprep.subr.mxu0 0.0
        %806 = vmatpush2.xpose.msra.mxu0 0.0
        %807 = vmatprep.subr.mxu0 0.0
        %808 = vmatpush2.xpose.msra.mxu0 0.0
        %809 = vmatprep.subr.mxu0 0.0
        %810 = vmatpush2.xpose.msra.mxu0 0.0
        %811 = vmatprep.subr.mxu0 0.0
        %812 = vmatpush2.xpose.msra.mxu0 0.0
        %813 = vmatprep.subr.mxu0 0.0
        %814 = vmatpush2.xpose.msra.mxu0 0.0
        %815 = vmatprep.subr.mxu0 0.0
        %816 = vmatpush2.xpose.msra.mxu0 0.0
        %817 = vmatprep.subr.mxu0 0.0
        %818 = vmatpush2.xpose.msra.mxu0 0.0
        %819 = vmatprep.subr.mxu0 0.0
        %820 = vmatpush2.xpose.msra.mxu0 0.0
        %821 = vmatprep.mubr.f32.mxu0 0.0
        %822 = vmatmul.mubr.f32.gmra.mxu0 %v752
        %v823 = vpop.f32.mrf.mxu0
        %v824 = vadd.f32 0.0, %v823
        %v825 = vpop.f32.mrf.mxu0
        %826 = vdwg.mxu0
        %v827 = vsel %vm750, %v824, -inf
        %828 = vmax.xlane.f32.xlu0 %v827
        %v829 = vpop.xlane.xlu0 %828
        %v830 = vsub.f32 %v824, %v829
        %v831 = vmul.f32 %v830, 1.442695
        %v832 = vpow.pop %v831
        %v833 = vsel %vm750, %v832, 0.0
        %834 = vadd.xlane.f32.xlu0 %v833
        %v835 = vpop.xlane.xlu0 %834
        %v836 = vrcp.pop %v835
        %v837 = vmul.f32 %v832, %v836
        %838 = vst.msk [vmem:[%s514] sm:$0xff] %vm750, %v837
        %v840 = vsel %vm750, %v837, 0
        %842 = vmatprep.subr.mxu0 0.0
        %843 = vmatpush1.msra.mxu0 0.0
        %844 = vmatprep.subr.mxu0 0.0
        %845 = vmatpush1.msra.mxu0 0.0
        %846 = vmatprep.subr.mxu0 0.0
        %847 = vmatpush1.msra.mxu0 0.0
        %848 = vmatprep.subr.mxu0 0.0
        %849 = vmatpush1.msra.mxu0 0.0
        %850 = vmatprep.subr.mxu0 0.0
        %851 = vmatpush1.msra.mxu0 0.0
        %852 = vmatprep.subr.mxu0 0.0
        %853 = vmatpush1.msra.mxu0 0.0
        %854 = vmatprep.subr.mxu0 0.0
        %855 = vmatpush1.msra.mxu0 0.0
        %856 = vmatprep.subr.mxu0 0.0
        %857 = vmatpush1.msra.mxu0 0.0
        %858 = vmatprep.subr.mxu0 0.0
        %859 = vmatpush1.msra.mxu0 0.0
        %860 = vmatprep.subr.mxu0 0.0
        %861 = vmatpush1.msra.mxu0 0.0
        %862 = vmatprep.subr.mxu0 0.0
        %863 = vmatpush1.msra.mxu0 0.0
        %864 = vmatprep.subr.mxu0 0.0
        %865 = vmatpush1.msra.mxu0 0.0
        %866 = vmatprep.subr.mxu0 0.0
        %867 = vmatpush1.msra.mxu0 0.0
        %868 = vmatprep.subr.mxu0 0.0
        %869 = vmatpush1.msra.mxu0 0.0
        %870 = vmatprep.subr.mxu0 0.0
        %871 = vmatpush1.msra.mxu0 0.0
        %872 = vmatprep.subr.mxu0 0.0
        %873 = vmatpush1.msra.mxu0 %v747
        %874 = vmatprep.subr.mxu0 0.0
        %875 = vmatpush2.msra.mxu0 0.0
        %876 = vmatprep.subr.mxu0 0.0
        %877 = vmatpush2.msra.mxu0 0.0
        %878 = vmatprep.subr.mxu0 0.0
        %879 = vmatpush2.msra.mxu0 0.0
        %880 = vmatprep.subr.mxu0 0.0
        %881 = vmatpush2.msra.mxu0 0.0
        %882 = vmatprep.subr.mxu0 0.0
        %883 = vmatpush2.msra.mxu0 0.0
        %884 = vmatprep.subr.mxu0 0.0
        %885 = vmatpush2.msra.mxu0 0.0
        %886 = vmatprep.subr.mxu0 0.0
        %887 = vmatpush2.msra.mxu0 0.0
        %888 = vmatprep.subr.mxu0 0.0
        %889 = vmatpush2.msra.mxu0 0.0
        %890 = vmatprep.subr.mxu0 0.0
        %891 = vmatpush2.msra.mxu0 0.0
        %892 = vmatprep.subr.mxu0 0.0
        %893 = vmatpush2.msra.mxu0 0.0
        %894 = vmatprep.subr.mxu0 0.0
        %895 = vmatpush2.msra.mxu0 0.0
        %896 = vmatprep.subr.mxu0 0.0
        %897 = vmatpush2.msra.mxu0 0.0
        %898 = vmatprep.subr.mxu0 0.0
        %899 = vmatpush2.msra.mxu0 0.0
        %900 = vmatprep.subr.mxu0 0.0
        %901 = vmatpush2.msra.mxu0 0.0
        %902 = vmatprep.subr.mxu0 0.0
        %903 = vmatpush2.msra.mxu0 0.0
        %904 = vmatprep.subr.mxu0 0.0
        %905 = vmatpush2.msra.mxu0 0.0
        %906 = vmatprep.mubr.f32.mxu0 0.0
        %907 = vmatmul.mubr.f32.gmra.mxu0 %v840
        %v908 = vpop.f32.mrf.mxu0
        %v909 = vadd.f32 0.0, %v908
        %v910 = vpop.f32.mrf.mxu0
        %911 = vdwg.mxu0
        %v912 = vld [vmem:[#allocation13] sm:$0xff]
        %913 = vrot.lane.b32.xlu0 %v593, 120
        %v914 = vpop.permute.xlu0 %913
        %915 = vrot.lane.b32.xlu0 %v670, 120
        %v916 = vpop.permute.xlu0 %915
        %v917 = vsel %vm750, %v914, 0
        %v919 = vsel %vm750, %v916, 0
        %921 = vmatprep.subr.mxu0 0.0
        %922 = vmatpush1.xpose.msra.mxu0 0.0
        %923 = vmatprep.subr.mxu0 0.0
        %924 = vmatpush1.xpose.msra.mxu0 0.0
        %925 = vmatprep.subr.mxu0 0.0
        %926 = vmatpush1.xpose.msra.mxu0 0.0
        %927 = vmatprep.subr.mxu0 0.0
        %928 = vmatpush1.xpose.msra.mxu0 0.0
        %929 = vmatprep.subr.mxu0 0.0
        %930 = vmatpush1.xpose.msra.mxu0 0.0
        %931 = vmatprep.subr.mxu0 0.0
        %932 = vmatpush1.xpose.msra.mxu0 0.0
        %933 = vmatprep.subr.mxu0 0.0
        %934 = vmatpush1.xpose.msra.mxu0 0.0
        %935 = vmatprep.subr.mxu0 0.0
        %936 = vmatpush1.xpose.msra.mxu0 0.0
        %937 = vmatprep.subr.mxu0 0.0
        %938 = vmatpush1.xpose.msra.mxu0 0.0
        %939 = vmatprep.subr.mxu0 0.0
        %940 = vmatpush1.xpose.msra.mxu0 0.0
        %941 = vmatprep.subr.mxu0 0.0
        %942 = vmatpush1.xpose.msra.mxu0 0.0
        %943 = vmatprep.subr.mxu0 0.0
        %944 = vmatpush1.xpose.msra.mxu0 0.0
        %945 = vmatprep.subr.mxu0 0.0
        %946 = vmatpush1.xpose.msra.mxu0 0.0
        %947 = vmatprep.subr.mxu0 0.0
        %948 = vmatpush1.xpose.msra.mxu0 0.0
        %949 = vmatprep.subr.mxu0 0.0
        %950 = vmatpush1.xpose.msra.mxu0 0.0
        %951 = vmatprep.subr.mxu0 0.0
        %952 = vmatpush1.xpose.msra.mxu0 %v919
        %953 = vmatprep.subr.mxu0 0.0
        %954 = vmatpush2.xpose.msra.mxu0 0.0
        %955 = vmatprep.subr.mxu0 0.0
        %956 = vmatpush2.xpose.msra.mxu0 0.0
        %957 = vmatprep.subr.mxu0 0.0
        %958 = vmatpush2.xpose.msra.mxu0 0.0
        %959 = vmatprep.subr.mxu0 0.0
        %960 = vmatpush2.xpose.msra.mxu0 0.0
        %961 = vmatprep.subr.mxu0 0.0
        %962 = vmatpush2.xpose.msra.mxu0 0.0
        %963 = vmatprep.subr.mxu0 0.0
        %964 = vmatpush2.xpose.msra.mxu0 0.0
        %965 = vmatprep.subr.mxu0 0.0
        %966 = vmatpush2.xpose.msra.mxu0 0.0
        %967 = vmatprep.subr.mxu0 0.0
        %968 = vmatpush2.xpose.msra.mxu0 0.0
        %969 = vmatprep.subr.mxu0 0.0
        %970 = vmatpush2.xpose.msra.mxu0 0.0
        %971 = vmatprep.subr.mxu0 0.0
        %972 = vmatpush2.xpose.msra.mxu0 0.0
        %973 = vmatprep.subr.mxu0 0.0
        %974 = vmatpush2.xpose.msra.mxu0 0.0
        %975 = vmatprep.subr.mxu0 0.0
        %976 = vmatpush2.xpose.msra.mxu0 0.0
        %977 = vmatprep.subr.mxu0 0.0
        %978 = vmatpush2.xpose.msra.mxu0 0.0
        %979 = vmatprep.subr.mxu0 0.0
        %980 = vmatpush2.xpose.msra.mxu0 0.0
        %981 = vmatprep.subr.mxu0 0.0
        %982 = vmatpush2.xpose.msra.mxu0 0.0
        %983 = vmatprep.subr.mxu0 0.0
        %984 = vmatpush2.xpose.msra.mxu0 0.0
        %985 = vmatprep.mubr.f32.mxu0 0.0
        %986 = vmatmul.mubr.f32.gmra.mxu0 %v917
        %v987 = vpop.f32.mrf.mxu0
        %v988 = vadd.f32 0.0, %v987
        %v989 = vpop.f32.mrf.mxu0
        %990 = vdwg.mxu0
        %v991 = vsel %vm750, %v988, -inf
        %992 = vmax.xlane.f32.xlu0 %v991
        %v993 = vpop.xlane.xlu0 %992
        %v994 = vsub.f32 %v988, %v993
        %v995 = vmul.f32 %v994, 1.442695
        %v996 = vpow.pop %v995
        %v997 = vsel %vm750, %v996, 0.0
        %998 = vadd.xlane.f32.xlu0 %v997
        %v999 = vpop.xlane.xlu0 %998
        %v1000 = vrcp.pop %v999
        %v1001 = vmul.f32 %v996, %v1000
        %s1002 = scalar_lea.vmem %s514, 8 [#allocation15]
        %1003 = vst.msk [vmem:[%s1002] sm:$0xff] %vm750, %v1001
        %1005 = vrot.lane.b32.xlu0 %v747, 120
        %v1006 = vpop.permute.xlu0 %1005
        %v1009 = vsel %vm750, %v1001, 0
        %1011 = vmatprep.subr.mxu0 0.0
        %1012 = vmatpush1.msra.mxu0 0.0
        %1013 = vmatprep.subr.mxu0 0.0
        %1014 = vmatpush1.msra.mxu0 0.0
        %1015 = vmatprep.subr.mxu0 0.0
        %1016 = vmatpush1.msra.mxu0 0.0
        %1017 = vmatprep.subr.mxu0 0.0
        %1018 = vmatpush1.msra.mxu0 0.0
        %1019 = vmatprep.subr.mxu0 0.0
        %1020 = vmatpush1.msra.mxu0 0.0
        %1021 = vmatprep.subr.mxu0 0.0
        %1022 = vmatpush1.msra.mxu0 0.0
        %1023 = vmatprep.subr.mxu0 0.0
        %1024 = vmatpush1.msra.mxu0 0.0
        %1025 = vmatprep.subr.mxu0 0.0
        %1026 = vmatpush1.msra.mxu0 0.0
        %1027 = vmatprep.subr.mxu0 0.0
        %1028 = vmatpush1.msra.mxu0 0.0
        %1029 = vmatprep.subr.mxu0 0.0
        %1030 = vmatpush1.msra.mxu0 0.0
        %1031 = vmatprep.subr.mxu0 0.0
        %1032 = vmatpush1.msra.mxu0 0.0
        %1033 = vmatprep.subr.mxu0 0.0
        %1034 = vmatpush1.msra.mxu0 0.0
        %1035 = vmatprep.subr.mxu0 0.0
        %1036 = vmatpush1.msra.mxu0 0.0
        %1037 = vmatprep.subr.mxu0 0.0
        %1038 = vmatpush1.msra.mxu0 0.0
        %1039 = vmatprep.subr.mxu0 0.0
        %1040 = vmatpush1.msra.mxu0 0.0
        %1041 = vmatprep.subr.mxu0 0.0
        %1042 = vmatpush1.msra.mxu0 %v1006
        %1043 = vmatprep.subr.mxu0 0.0
        %1044 = vmatpush2.msra.mxu0 0.0
        %1045 = vmatprep.subr.mxu0 0.0
        %1046 = vmatpush2.msra.mxu0 0.0
        %1047 = vmatprep.subr.mxu0 0.0
        %1048 = vmatpush2.msra.mxu0 0.0
        %1049 = vmatprep.subr.mxu0 0.0
        %1050 = vmatpush2.msra.mxu0 0.0
        %1051 = vmatprep.subr.mxu0 0.0
        %1052 = vmatpush2.msra.mxu0 0.0
        %1053 = vmatprep.subr.mxu0 0.0
        %1054 = vmatpush2.msra.mxu0 0.0
        %1055 = vmatprep.subr.mxu0 0.0
        %1056 = vmatpush2.msra.mxu0 0.0
        %1057 = vmatprep.subr.mxu0 0.0
        %1058 = vmatpush2.msra.mxu0 0.0
        %1059 = vmatprep.subr.mxu0 0.0
        %1060 = vmatpush2.msra.mxu0 0.0
        %1061 = vmatprep.subr.mxu0 0.0
        %1062 = vmatpush2.msra.mxu0 0.0
        %1063 = vmatprep.subr.mxu0 0.0
        %1064 = vmatpush2.msra.mxu0 0.0
        %1065 = vmatprep.subr.mxu0 0.0
        %1066 = vmatpush2.msra.mxu0 0.0
        %1067 = vmatprep.subr.mxu0 0.0
        %1068 = vmatpush2.msra.mxu0 0.0
        %1069 = vmatprep.subr.mxu0 0.0
        %1070 = vmatpush2.msra.mxu0 0.0
        %1071 = vmatprep.subr.mxu0 0.0
        %1072 = vmatpush2.msra.mxu0 0.0
        %1073 = vmatprep.subr.mxu0 0.0
        %1074 = vmatpush2.msra.mxu0 0.0
        %1075 = vmatprep.mubr.f32.mxu0 0.0
        %1076 = vmatmul.mubr.f32.gmra.mxu0 %v1009
        %v1077 = vpop.f32.mrf.mxu0
        %v1078 = vadd.f32 0.0, %v1077
        %v1079 = vpop.f32.mrf.mxu0
        %1080 = vdwg.mxu0
        %v1081 = vld [vmem:[#allocation13 + $0x8] sm:$0xff]
        %v1083 = vsel %vm750, %v1078, 0
        %1085 = vmatprep.subr.mxu0 0.0
        %1086 = vmatpush1.msra.mxu0 0.0
        %1087 = vmatprep.subr.mxu0 0.0
        %1088 = vmatpush1.msra.mxu0 0.0
        %1089 = vmatprep.subr.mxu0 0.0
        %1090 = vmatpush1.msra.mxu0 0.0
        %1091 = vmatprep.subr.mxu0 0.0
        %1092 = vmatpush1.msra.mxu0 0.0
        %1093 = vmatprep.subr.mxu0 0.0
        %1094 = vmatpush1.msra.mxu0 0.0
        %1095 = vmatprep.subr.mxu0 0.0
        %1096 = vmatpush1.msra.mxu0 0.0
        %1097 = vmatprep.subr.mxu0 0.0
        %1098 = vmatpush1.msra.mxu0 0.0
        %1099 = vmatprep.subr.mxu0 0.0
        %1100 = vmatpush1.msra.mxu0 0.0
        %1101 = vmatprep.subr.mxu0 0.0
        %1102 = vmatpush1.msra.mxu0 0.0
        %1103 = vmatprep.subr.mxu0 0.0
        %1104 = vmatpush1.msra.mxu0 0.0
        %1105 = vmatprep.subr.mxu0 0.0
        %1106 = vmatpush1.msra.mxu0 0.0
        %1107 = vmatprep.subr.mxu0 0.0
        %1108 = vmatpush1.msra.mxu0 0.0
        %1109 = vmatprep.subr.mxu0 0.0
        %1110 = vmatpush1.msra.mxu0 0.0
        %1111 = vmatprep.subr.mxu0 0.0
        %1112 = vmatpush1.msra.mxu0 0.0
        %1113 = vmatprep.subr.mxu0 0.0
        %1114 = vmatpush1.msra.mxu0 0.0
        %1115 = vmatprep.subr.mxu0 0.0
        %1116 = vmatpush1.msra.mxu0 %v1081
        %1117 = vmatprep.subr.mxu0 0.0
        %1118 = vmatpush2.msra.mxu0 0.0
        %1119 = vmatprep.subr.mxu0 0.0
        %1120 = vmatpush2.msra.mxu0 0.0
        %1121 = vmatprep.subr.mxu0 0.0
        %1122 = vmatpush2.msra.mxu0 0.0
        %1123 = vmatprep.subr.mxu0 0.0
        %1124 = vmatpush2.msra.mxu0 0.0
        %1125 = vmatprep.subr.mxu0 0.0
        %1126 = vmatpush2.msra.mxu0 0.0
        %1127 = vmatprep.subr.mxu0 0.0
        %1128 = vmatpush2.msra.mxu0 0.0
        %1129 = vmatprep.subr.mxu0 0.0
        %1130 = vmatpush2.msra.mxu0 0.0
        %1131 = vmatprep.subr.mxu0 0.0
        %1132 = vmatpush2.msra.mxu0 0.0
        %1133 = vmatprep.subr.mxu0 0.0
        %1134 = vmatpush2.msra.mxu0 0.0
        %1135 = vmatprep.subr.mxu0 0.0
        %1136 = vmatpush2.msra.mxu0 0.0
        %1137 = vmatprep.subr.mxu0 0.0
        %1138 = vmatpush2.msra.mxu0 0.0
        %1139 = vmatprep.subr.mxu0 0.0
        %1140 = vmatpush2.msra.mxu0 0.0
        %1141 = vmatprep.subr.mxu0 0.0
        %1142 = vmatpush2.msra.mxu0 0.0
        %1143 = vmatprep.subr.mxu0 0.0
        %1144 = vmatpush2.msra.mxu0 0.0
        %1145 = vmatprep.subr.mxu0 0.0
        %1146 = vmatpush2.msra.mxu0 0.0
        %1147 = vmatprep.subr.mxu0 0.0
        %1148 = vmatpush2.msra.mxu0 0.0
        %1149 = vmatprep.mubr.f32.mxu0 0.0
        %1150 = vmatmul.mubr.f32.gmra.mxu0 %v1083
        %v1151 = vpop.f32.mrf.mxu0
        %v1152 = vadd.f32 0.0, %v1151
        %v1153 = vpop.f32.mrf.mxu0
        %1154 = vdwg.mxu0
        %v1156 = vsel %vm750, %v909, 0
        %1158 = vmatprep.subr.mxu0 0.0
        %1159 = vmatpush1.msra.mxu0 0.0
        %1160 = vmatprep.subr.mxu0 0.0
        %1161 = vmatpush1.msra.mxu0 0.0
        %1162 = vmatprep.subr.mxu0 0.0
        %1163 = vmatpush1.msra.mxu0 0.0
        %1164 = vmatprep.subr.mxu0 0.0
        %1165 = vmatpush1.msra.mxu0 0.0
        %1166 = vmatprep.subr.mxu0 0.0
        %1167 = vmatpush1.msra.mxu0 0.0
        %1168 = vmatprep.subr.mxu0 0.0
        %1169 = vmatpush1.msra.mxu0 0.0
        %1170 = vmatprep.subr.mxu0 0.0
        %1171 = vmatpush1.msra.mxu0 0.0
        %1172 = vmatprep.subr.mxu0 0.0
        %1173 = vmatpush1.msra.mxu0 0.0
        %1174 = vmatprep.subr.mxu0 0.0
        %1175 = vmatpush1.msra.mxu0 0.0
        %1176 = vmatprep.subr.mxu0 0.0
        %1177 = vmatpush1.msra.mxu0 0.0
        %1178 = vmatprep.subr.mxu0 0.0
        %1179 = vmatpush1.msra.mxu0 0.0
        %1180 = vmatprep.subr.mxu0 0.0
        %1181 = vmatpush1.msra.mxu0 0.0
        %1182 = vmatprep.subr.mxu0 0.0
        %1183 = vmatpush1.msra.mxu0 0.0
        %1184 = vmatprep.subr.mxu0 0.0
        %1185 = vmatpush1.msra.mxu0 0.0
        %1186 = vmatprep.subr.mxu0 0.0
        %1187 = vmatpush1.msra.mxu0 0.0
        %1188 = vmatprep.subr.mxu0 0.0
        %1189 = vmatpush1.msra.mxu0 %v912
        %1190 = vmatprep.subr.mxu0 0.0
        %1191 = vmatpush2.msra.mxu0 0.0
        %1192 = vmatprep.subr.mxu0 0.0
        %1193 = vmatpush2.msra.mxu0 0.0
        %1194 = vmatprep.subr.mxu0 0.0
        %1195 = vmatpush2.msra.mxu0 0.0
        %1196 = vmatprep.subr.mxu0 0.0
        %1197 = vmatpush2.msra.mxu0 0.0
        %1198 = vmatprep.subr.mxu0 0.0
        %1199 = vmatpush2.msra.mxu0 0.0
        %1200 = vmatprep.subr.mxu0 0.0
        %1201 = vmatpush2.msra.mxu0 0.0
        %1202 = vmatprep.subr.mxu0 0.0
        %1203 = vmatpush2.msra.mxu0 0.0
        %1204 = vmatprep.subr.mxu0 0.0
        %1205 = vmatpush2.msra.mxu0 0.0
        %1206 = vmatprep.subr.mxu0 0.0
        %1207 = vmatpush2.msra.mxu0 0.0
        %1208 = vmatprep.subr.mxu0 0.0
        %1209 = vmatpush2.msra.mxu0 0.0
        %1210 = vmatprep.subr.mxu0 0.0
        %1211 = vmatpush2.msra.mxu0 0.0
        %1212 = vmatprep.subr.mxu0 0.0
        %1213 = vmatpush2.msra.mxu0 0.0
        %1214 = vmatprep.subr.mxu0 0.0
        %1215 = vmatpush2.msra.mxu0 0.0
        %1216 = vmatprep.subr.mxu0 0.0
        %1217 = vmatpush2.msra.mxu0 0.0
        %1218 = vmatprep.subr.mxu0 0.0
        %1219 = vmatpush2.msra.mxu0 0.0
        %1220 = vmatprep.subr.mxu0 0.0
        %1221 = vmatpush2.msra.mxu0 0.0
        %1222 = vmatprep.mubr.f32.mxu0 0.0
        %1223 = vmatmul.mubr.f32.gmra.mxu0 %v1156
        %v1224 = vpop.f32.mrf.mxu0
        %v1225 = vadd.f32 %v1152, %v1224
        %v1226 = vpop.f32.mrf.mxu0
        %1227 = vdwg.mxu0
        %1228 = vrot.lane.b32.xlu0 %v593, 112
        %v1229 = vpop.permute.xlu0 %1228
        %1230 = vrot.lane.b32.xlu0 %v670, 112
        %v1231 = vpop.permute.xlu0 %1230
        %v1232 = vsel %vm750, %v1229, 0
        %v1234 = vsel %vm750, %v1231, 0
        %1236 = vmatprep.subr.mxu0 0.0
        %1237 = vmatpush1.xpose.msra.mxu0 0.0
        %1238 = vmatprep.subr.mxu0 0.0
        %1239 = vmatpush1.xpose.msra.mxu0 0.0
        %1240 = vmatprep.subr.mxu0 0.0
        %1241 = vmatpush1.xpose.msra.mxu0 0.0
        %1242 = vmatprep.subr.mxu0 0.0
        %1243 = vmatpush1.xpose.msra.mxu0 0.0
        %1244 = vmatprep.subr.mxu0 0.0
        %1245 = vmatpush1.xpose.msra.mxu0 0.0
        %1246 = vmatprep.subr.mxu0 0.0
        %1247 = vmatpush1.xpose.msra.mxu0 0.0
        %1248 = vmatprep.subr.mxu0 0.0
        %1249 = vmatpush1.xpose.msra.mxu0 0.0
        %1250 = vmatprep.subr.mxu0 0.0
        %1251 = vmatpush1.xpose.msra.mxu0 0.0
        %1252 = vmatprep.subr.mxu0 0.0
        %1253 = vmatpush1.xpose.msra.mxu0 0.0
        %1254 = vmatprep.subr.mxu0 0.0
        %1255 = vmatpush1.xpose.msra.mxu0 0.0
        %1256 = vmatprep.subr.mxu0 0.0
        %1257 = vmatpush1.xpose.msra.mxu0 0.0
        %1258 = vmatprep.subr.mxu0 0.0
        %1259 = vmatpush1.xpose.msra.mxu0 0.0
        %1260 = vmatprep.subr.mxu0 0.0
        %1261 = vmatpush1.xpose.msra.mxu0 0.0
        %1262 = vmatprep.subr.mxu0 0.0
        %1263 = vmatpush1.xpose.msra.mxu0 0.0
        %1264 = vmatprep.subr.mxu0 0.0
        %1265 = vmatpush1.xpose.msra.mxu0 0.0
        %1266 = vmatprep.subr.mxu0 0.0
        %1267 = vmatpush1.xpose.msra.mxu0 %v1234
        %1268 = vmatprep.subr.mxu0 0.0
        %1269 = vmatpush2.xpose.msra.mxu0 0.0
        %1270 = vmatprep.subr.mxu0 0.0
        %1271 = vmatpush2.xpose.msra.mxu0 0.0
        %1272 = vmatprep.subr.mxu0 0.0
        %1273 = vmatpush2.xpose.msra.mxu0 0.0
        %1274 = vmatprep.subr.mxu0 0.0
        %1275 = vmatpush2.xpose.msra.mxu0 0.0
        %1276 = vmatprep.subr.mxu0 0.0
        %1277 = vmatpush2.xpose.msra.mxu0 0.0
        %1278 = vmatprep.subr.mxu0 0.0
        %1279 = vmatpush2.xpose.msra.mxu0 0.0
        %1280 = vmatprep.subr.mxu0 0.0
        %1281 = vmatpush2.xpose.msra.mxu0 0.0
        %1282 = vmatprep.subr.mxu0 0.0
        %1283 = vmatpush2.xpose.msra.mxu0 0.0
        %1284 = vmatprep.subr.mxu0 0.0
        %1285 = vmatpush2.xpose.msra.mxu0 0.0
        %1286 = vmatprep.subr.mxu0 0.0
        %1287 = vmatpush2.xpose.msra.mxu0 0.0
        %1288 = vmatprep.subr.mxu0 0.0
        %1289 = vmatpush2.xpose.msra.mxu0 0.0
        %1290 = vmatprep.subr.mxu0 0.0
        %1291 = vmatpush2.xpose.msra.mxu0 0.0
        %1292 = vmatprep.subr.mxu0 0.0
        %1293 = vmatpush2.xpose.msra.mxu0 0.0
        %1294 = vmatprep.subr.mxu0 0.0
        %1295 = vmatpush2.xpose.msra.mxu0 0.0
        %1296 = vmatprep.subr.mxu0 0.0
        %1297 = vmatpush2.xpose.msra.mxu0 0.0
        %1298 = vmatprep.subr.mxu0 0.0
        %1299 = vmatpush2.xpose.msra.mxu0 0.0
        %1300 = vmatprep.mubr.f32.mxu0 0.0
        %1301 = vmatmul.mubr.f32.gmra.mxu0 %v1232
        %v1302 = vpop.f32.mrf.mxu0
        %v1303 = vadd.f32 0.0, %v1302
        %v1304 = vpop.f32.mrf.mxu0
        %1305 = vdwg.mxu0
        %v1306 = vsel %vm750, %v1303, -inf
        %1307 = vmax.xlane.f32.xlu0 %v1306
        %v1308 = vpop.xlane.xlu0 %1307
        %v1309 = vsub.f32 %v1303, %v1308
        %v1310 = vmul.f32 %v1309, 1.442695
        %v1311 = vpow.pop %v1310
        %v1312 = vsel %vm750, %v1311, 0.0
        %1313 = vadd.xlane.f32.xlu0 %v1312
        %v1314 = vpop.xlane.xlu0 %1313
        %v1315 = vrcp.pop %v1314
        %v1316 = vmul.f32 %v1311, %v1315
        %s1317 = scalar_lea.vmem %s514, 16 [#allocation15]
        %1318 = vst.msk [vmem:[%s1317] sm:$0xff] %vm750, %v1316
        %1319 = vrot.lane.b32.xlu0 %v747, 112
        %v1320 = vpop.permute.xlu0 %1319
        %v1323 = vsel %vm750, %v1316, 0
        %1325 = vmatprep.subr.mxu0 0.0
        %1326 = vmatpush1.msra.mxu0 0.0
        %1327 = vmatprep.subr.mxu0 0.0
        %1328 = vmatpush1.msra.mxu0 0.0
        %1329 = vmatprep.subr.mxu0 0.0
        %1330 = vmatpush1.msra.mxu0 0.0
        %1331 = vmatprep.subr.mxu0 0.0
        %1332 = vmatpush1.msra.mxu0 0.0
        %1333 = vmatprep.subr.mxu0 0.0
        %1334 = vmatpush1.msra.mxu0 0.0
        %1335 = vmatprep.subr.mxu0 0.0
        %1336 = vmatpush1.msra.mxu0 0.0
        %1337 = vmatprep.subr.mxu0 0.0
        %1338 = vmatpush1.msra.mxu0 0.0
        %1339 = vmatprep.subr.mxu0 0.0
        %1340 = vmatpush1.msra.mxu0 0.0
        %1341 = vmatprep.subr.mxu0 0.0
        %1342 = vmatpush1.msra.mxu0 0.0
        %1343 = vmatprep.subr.mxu0 0.0
        %1344 = vmatpush1.msra.mxu0 0.0
        %1345 = vmatprep.subr.mxu0 0.0
        %1346 = vmatpush1.msra.mxu0 0.0
        %1347 = vmatprep.subr.mxu0 0.0
        %1348 = vmatpush1.msra.mxu0 0.0
        %1349 = vmatprep.subr.mxu0 0.0
        %1350 = vmatpush1.msra.mxu0 0.0
        %1351 = vmatprep.subr.mxu0 0.0
        %1352 = vmatpush1.msra.mxu0 0.0
        %1353 = vmatprep.subr.mxu0 0.0
        %1354 = vmatpush1.msra.mxu0 0.0
        %1355 = vmatprep.subr.mxu0 0.0
        %1356 = vmatpush1.msra.mxu0 %v1320
        %1357 = vmatprep.subr.mxu0 0.0
        %1358 = vmatpush2.msra.mxu0 0.0
        %1359 = vmatprep.subr.mxu0 0.0
        %1360 = vmatpush2.msra.mxu0 0.0
        %1361 = vmatprep.subr.mxu0 0.0
        %1362 = vmatpush2.msra.mxu0 0.0
        %1363 = vmatprep.subr.mxu0 0.0
        %1364 = vmatpush2.msra.mxu0 0.0
        %1365 = vmatprep.subr.mxu0 0.0
        %1366 = vmatpush2.msra.mxu0 0.0
        %1367 = vmatprep.subr.mxu0 0.0
        %1368 = vmatpush2.msra.mxu0 0.0
        %1369 = vmatprep.subr.mxu0 0.0
        %1370 = vmatpush2.msra.mxu0 0.0
        %1371 = vmatprep.subr.mxu0 0.0
        %1372 = vmatpush2.msra.mxu0 0.0
        %1373 = vmatprep.subr.mxu0 0.0
        %1374 = vmatpush2.msra.mxu0 0.0
        %1375 = vmatprep.subr.mxu0 0.0
        %1376 = vmatpush2.msra.mxu0 0.0
        %1377 = vmatprep.subr.mxu0 0.0
        %1378 = vmatpush2.msra.mxu0 0.0
        %1379 = vmatprep.subr.mxu0 0.0
        %1380 = vmatpush2.msra.mxu0 0.0
        %1381 = vmatprep.subr.mxu0 0.0
        %1382 = vmatpush2.msra.mxu0 0.0
        %1383 = vmatprep.subr.mxu0 0.0
        %1384 = vmatpush2.msra.mxu0 0.0
        %1385 = vmatprep.subr.mxu0 0.0
        %1386 = vmatpush2.msra.mxu0 0.0
        %1387 = vmatprep.subr.mxu0 0.0
        %1388 = vmatpush2.msra.mxu0 0.0
        %1389 = vmatprep.mubr.f32.mxu0 0.0
        %1390 = vmatmul.mubr.f32.gmra.mxu0 %v1323
        %v1391 = vpop.f32.mrf.mxu0
        %v1392 = vadd.f32 0.0, %v1391
        %v1393 = vpop.f32.mrf.mxu0
        %1394 = vdwg.mxu0
        %v1395 = vld [vmem:[#allocation13 + $0x10] sm:$0xff]
        %v1397 = vsel %vm750, %v1392, 0
        %1399 = vmatprep.subr.mxu0 0.0
        %1400 = vmatpush1.msra.mxu0 0.0
        %1401 = vmatprep.subr.mxu0 0.0
        %1402 = vmatpush1.msra.mxu0 0.0
        %1403 = vmatprep.subr.mxu0 0.0
        %1404 = vmatpush1.msra.mxu0 0.0
        %1405 = vmatprep.subr.mxu0 0.0
        %1406 = vmatpush1.msra.mxu0 0.0
        %1407 = vmatprep.subr.mxu0 0.0
        %1408 = vmatpush1.msra.mxu0 0.0
        %1409 = vmatprep.subr.mxu0 0.0
        %1410 = vmatpush1.msra.mxu0 0.0
        %1411 = vmatprep.subr.mxu0 0.0
        %1412 = vmatpush1.msra.mxu0 0.0
        %1413 = vmatprep.subr.mxu0 0.0
        %1414 = vmatpush1.msra.mxu0 0.0
        %1415 = vmatprep.subr.mxu0 0.0
        %1416 = vmatpush1.msra.mxu0 0.0
        %1417 = vmatprep.subr.mxu0 0.0
        %1418 = vmatpush1.msra.mxu0 0.0
        %1419 = vmatprep.subr.mxu0 0.0
        %1420 = vmatpush1.msra.mxu0 0.0
        %1421 = vmatprep.subr.mxu0 0.0
        %1422 = vmatpush1.msra.mxu0 0.0
        %1423 = vmatprep.subr.mxu0 0.0
        %1424 = vmatpush1.msra.mxu0 0.0
        %1425 = vmatprep.subr.mxu0 0.0
        %1426 = vmatpush1.msra.mxu0 0.0
        %1427 = vmatprep.subr.mxu0 0.0
        %1428 = vmatpush1.msra.mxu0 0.0
        %1429 = vmatprep.subr.mxu0 0.0
        %1430 = vmatpush1.msra.mxu0 %v1395
        %1431 = vmatprep.subr.mxu0 0.0
        %1432 = vmatpush2.msra.mxu0 0.0
        %1433 = vmatprep.subr.mxu0 0.0
        %1434 = vmatpush2.msra.mxu0 0.0
        %1435 = vmatprep.subr.mxu0 0.0
        %1436 = vmatpush2.msra.mxu0 0.0
        %1437 = vmatprep.subr.mxu0 0.0
        %1438 = vmatpush2.msra.mxu0 0.0
        %1439 = vmatprep.subr.mxu0 0.0
        %1440 = vmatpush2.msra.mxu0 0.0
        %1441 = vmatprep.subr.mxu0 0.0
        %1442 = vmatpush2.msra.mxu0 0.0
        %1443 = vmatprep.subr.mxu0 0.0
        %1444 = vmatpush2.msra.mxu0 0.0
        %1445 = vmatprep.subr.mxu0 0.0
        %1446 = vmatpush2.msra.mxu0 0.0
        %1447 = vmatprep.subr.mxu0 0.0
        %1448 = vmatpush2.msra.mxu0 0.0
        %1449 = vmatprep.subr.mxu0 0.0
        %1450 = vmatpush2.msra.mxu0 0.0
        %1451 = vmatprep.subr.mxu0 0.0
        %1452 = vmatpush2.msra.mxu0 0.0
        %1453 = vmatprep.subr.mxu0 0.0
        %1454 = vmatpush2.msra.mxu0 0.0
        %1455 = vmatprep.subr.mxu0 0.0
        %1456 = vmatpush2.msra.mxu0 0.0
        %1457 = vmatprep.subr.mxu0 0.0
        %1458 = vmatpush2.msra.mxu0 0.0
        %1459 = vmatprep.subr.mxu0 0.0
        %1460 = vmatpush2.msra.mxu0 0.0
        %1461 = vmatprep.subr.mxu0 0.0
        %1462 = vmatpush2.msra.mxu0 0.0
        %1463 = vmatprep.mubr.f32.mxu0 0.0
        %1464 = vmatmul.mubr.f32.gmra.mxu0 %v1397
        %v1465 = vpop.f32.mrf.mxu0
        %v1466 = vadd.f32 0.0, %v1465
        %v1467 = vpop.f32.mrf.mxu0
        %1468 = vdwg.mxu0
        %v1469 = vadd.f32 %v1225, %v1466
        %1470 = vrot.lane.b32.xlu0 %v593, 104
        %v1471 = vpop.permute.xlu0 %1470
        %1472 = vrot.lane.b32.xlu0 %v670, 104
        %v1473 = vpop.permute.xlu0 %1472
        %v1474 = vsel %vm750, %v1471, 0
        %v1476 = vsel %vm750, %v1473, 0
        %1478 = vmatprep.subr.mxu0 0.0
        %1479 = vmatpush1.xpose.msra.mxu0 0.0
        %1480 = vmatprep.subr.mxu0 0.0
        %1481 = vmatpush1.xpose.msra.mxu0 0.0
        %1482 = vmatprep.subr.mxu0 0.0
        %1483 = vmatpush1.xpose.msra.mxu0 0.0
        %1484 = vmatprep.subr.mxu0 0.0
        %1485 = vmatpush1.xpose.msra.mxu0 0.0
        %1486 = vmatprep.subr.mxu0 0.0
        %1487 = vmatpush1.xpose.msra.mxu0 0.0
        %1488 = vmatprep.subr.mxu0 0.0
        %1489 = vmatpush1.xpose.msra.mxu0 0.0
        %1490 = vmatprep.subr.mxu0 0.0
        %1491 = vmatpush1.xpose.msra.mxu0 0.0
        %1492 = vmatprep.subr.mxu0 0.0
        %1493 = vmatpush1.xpose.msra.mxu0 0.0
        %1494 = vmatprep.subr.mxu0 0.0
        %1495 = vmatpush1.xpose.msra.mxu0 0.0
        %1496 = vmatprep.subr.mxu0 0.0
        %1497 = vmatpush1.xpose.msra.mxu0 0.0
        %1498 = vmatprep.subr.mxu0 0.0
        %1499 = vmatpush1.xpose.msra.mxu0 0.0
        %1500 = vmatprep.subr.mxu0 0.0
        %1501 = vmatpush1.xpose.msra.mxu0 0.0
        %1502 = vmatprep.subr.mxu0 0.0
        %1503 = vmatpush1.xpose.msra.mxu0 0.0
        %1504 = vmatprep.subr.mxu0 0.0
        %1505 = vmatpush1.xpose.msra.mxu0 0.0
        %1506 = vmatprep.subr.mxu0 0.0
        %1507 = vmatpush1.xpose.msra.mxu0 0.0
        %1508 = vmatprep.subr.mxu0 0.0
        %1509 = vmatpush1.xpose.msra.mxu0 %v1476
        %1510 = vmatprep.subr.mxu0 0.0
        %1511 = vmatpush2.xpose.msra.mxu0 0.0
        %1512 = vmatprep.subr.mxu0 0.0
        %1513 = vmatpush2.xpose.msra.mxu0 0.0
        %1514 = vmatprep.subr.mxu0 0.0
        %1515 = vmatpush2.xpose.msra.mxu0 0.0
        %1516 = vmatprep.subr.mxu0 0.0
        %1517 = vmatpush2.xpose.msra.mxu0 0.0
        %1518 = vmatprep.subr.mxu0 0.0
        %1519 = vmatpush2.xpose.msra.mxu0 0.0
        %1520 = vmatprep.subr.mxu0 0.0
        %1521 = vmatpush2.xpose.msra.mxu0 0.0
        %1522 = vmatprep.subr.mxu0 0.0
        %1523 = vmatpush2.xpose.msra.mxu0 0.0
        %1524 = vmatprep.subr.mxu0 0.0
        %1525 = vmatpush2.xpose.msra.mxu0 0.0
        %1526 = vmatprep.subr.mxu0 0.0
        %1527 = vmatpush2.xpose.msra.mxu0 0.0
        %1528 = vmatprep.subr.mxu0 0.0
        %1529 = vmatpush2.xpose.msra.mxu0 0.0
        %1530 = vmatprep.subr.mxu0 0.0
        %1531 = vmatpush2.xpose.msra.mxu0 0.0
        %1532 = vmatprep.subr.mxu0 0.0
        %1533 = vmatpush2.xpose.msra.mxu0 0.0
        %1534 = vmatprep.subr.mxu0 0.0
        %1535 = vmatpush2.xpose.msra.mxu0 0.0
        %1536 = vmatprep.subr.mxu0 0.0
        %1537 = vmatpush2.xpose.msra.mxu0 0.0
        %1538 = vmatprep.subr.mxu0 0.0
        %1539 = vmatpush2.xpose.msra.mxu0 0.0
        %1540 = vmatprep.subr.mxu0 0.0
        %1541 = vmatpush2.xpose.msra.mxu0 0.0
        %1542 = vmatprep.mubr.f32.mxu0 0.0
        %1543 = vmatmul.mubr.f32.gmra.mxu0 %v1474
        %v1544 = vpop.f32.mrf.mxu0
        %v1545 = vadd.f32 0.0, %v1544
        %v1546 = vpop.f32.mrf.mxu0
        %1547 = vdwg.mxu0
        %v1548 = vsel %vm750, %v1545, -inf
        %1549 = vmax.xlane.f32.xlu0 %v1548
        %v1550 = vpop.xlane.xlu0 %1549
        %v1551 = vsub.f32 %v1545, %v1550
        %v1552 = vmul.f32 %v1551, 1.442695
        %v1553 = vpow.pop %v1552
        %v1554 = vsel %vm750, %v1553, 0.0
        %1555 = vadd.xlane.f32.xlu0 %v1554
        %v1556 = vpop.xlane.xlu0 %1555
        %v1557 = vrcp.pop %v1556
        %v1558 = vmul.f32 %v1553, %v1557
        %s1559 = scalar_lea.vmem %s514, 24 [#allocation15]
        %1560 = vst.msk [vmem:[%s1559] sm:$0xff] %vm750, %v1558
        %1561 = vrot.lane.b32.xlu0 %v747, 104
        %v1562 = vpop.permute.xlu0 %1561
        %v1565 = vsel %vm750, %v1558, 0
        %1567 = vmatprep.subr.mxu0 0.0
        %1568 = vmatpush1.msra.mxu0 0.0
        %1569 = vmatprep.subr.mxu0 0.0
        %1570 = vmatpush1.msra.mxu0 0.0
        %1571 = vmatprep.subr.mxu0 0.0
        %1572 = vmatpush1.msra.mxu0 0.0
        %1573 = vmatprep.subr.mxu0 0.0
        %1574 = vmatpush1.msra.mxu0 0.0
        %1575 = vmatprep.subr.mxu0 0.0
        %1576 = vmatpush1.msra.mxu0 0.0
        %1577 = vmatprep.subr.mxu0 0.0
        %1578 = vmatpush1.msra.mxu0 0.0
        %1579 = vmatprep.subr.mxu0 0.0
        %1580 = vmatpush1.msra.mxu0 0.0
        %1581 = vmatprep.subr.mxu0 0.0
        %1582 = vmatpush1.msra.mxu0 0.0
        %1583 = vmatprep.subr.mxu0 0.0
        %1584 = vmatpush1.msra.mxu0 0.0
        %1585 = vmatprep.subr.mxu0 0.0
        %1586 = vmatpush1.msra.mxu0 0.0
        %1587 = vmatprep.subr.mxu0 0.0
        %1588 = vmatpush1.msra.mxu0 0.0
        %1589 = vmatprep.subr.mxu0 0.0
        %1590 = vmatpush1.msra.mxu0 0.0
        %1591 = vmatprep.subr.mxu0 0.0
        %1592 = vmatpush1.msra.mxu0 0.0
        %1593 = vmatprep.subr.mxu0 0.0
        %1594 = vmatpush1.msra.mxu0 0.0
        %1595 = vmatprep.subr.mxu0 0.0
        %1596 = vmatpush1.msra.mxu0 0.0
        %1597 = vmatprep.subr.mxu0 0.0
        %1598 = vmatpush1.msra.mxu0 %v1562
        %1599 = vmatprep.subr.mxu0 0.0
        %1600 = vmatpush2.msra.mxu0 0.0
        %1601 = vmatprep.subr.mxu0 0.0
        %1602 = vmatpush2.msra.mxu0 0.0
        %1603 = vmatprep.subr.mxu0 0.0
        %1604 = vmatpush2.msra.mxu0 0.0
        %1605 = vmatprep.subr.mxu0 0.0
        %1606 = vmatpush2.msra.mxu0 0.0
        %1607 = vmatprep.subr.mxu0 0.0
        %1608 = vmatpush2.msra.mxu0 0.0
        %1609 = vmatprep.subr.mxu0 0.0
        %1610 = vmatpush2.msra.mxu0 0.0
        %1611 = vmatprep.subr.mxu0 0.0
        %1612 = vmatpush2.msra.mxu0 0.0
        %1613 = vmatprep.subr.mxu0 0.0
        %1614 = vmatpush2.msra.mxu0 0.0
        %1615 = vmatprep.subr.mxu0 0.0
        %1616 = vmatpush2.msra.mxu0 0.0
        %1617 = vmatprep.subr.mxu0 0.0
        %1618 = vmatpush2.msra.mxu0 0.0
        %1619 = vmatprep.subr.mxu0 0.0
        %1620 = vmatpush2.msra.mxu0 0.0
        %1621 = vmatprep.subr.mxu0 0.0
        %1622 = vmatpush2.msra.mxu0 0.0
        %1623 = vmatprep.subr.mxu0 0.0
        %1624 = vmatpush2.msra.mxu0 0.0
        %1625 = vmatprep.subr.mxu0 0.0
        %1626 = vmatpush2.msra.mxu0 0.0
        %1627 = vmatprep.subr.mxu0 0.0
        %1628 = vmatpush2.msra.mxu0 0.0
        %1629 = vmatprep.subr.mxu0 0.0
        %1630 = vmatpush2.msra.mxu0 0.0
        %1631 = vmatprep.mubr.f32.mxu0 0.0
        %1632 = vmatmul.mubr.f32.gmra.mxu0 %v1565
        %v1633 = vpop.f32.mrf.mxu0
        %v1634 = vadd.f32 0.0, %v1633
        %v1635 = vpop.f32.mrf.mxu0
        %1636 = vdwg.mxu0
        %v1637 = vld [vmem:[#allocation13 + $0x18] sm:$0xff]
        %v1639 = vsel %vm750, %v1634, 0
        %1641 = vmatprep.subr.mxu0 0.0
        %1642 = vmatpush1.msra.mxu0 0.0
        %1643 = vmatprep.subr.mxu0 0.0
        %1644 = vmatpush1.msra.mxu0 0.0
        %1645 = vmatprep.subr.mxu0 0.0
        %1646 = vmatpush1.msra.mxu0 0.0
        %1647 = vmatprep.subr.mxu0 0.0
        %1648 = vmatpush1.msra.mxu0 0.0
        %1649 = vmatprep.subr.mxu0 0.0
        %1650 = vmatpush1.msra.mxu0 0.0
        %1651 = vmatprep.subr.mxu0 0.0
        %1652 = vmatpush1.msra.mxu0 0.0
        %1653 = vmatprep.subr.mxu0 0.0
        %1654 = vmatpush1.msra.mxu0 0.0
        %1655 = vmatprep.subr.mxu0 0.0
        %1656 = vmatpush1.msra.mxu0 0.0
        %1657 = vmatprep.subr.mxu0 0.0
        %1658 = vmatpush1.msra.mxu0 0.0
        %1659 = vmatprep.subr.mxu0 0.0
        %1660 = vmatpush1.msra.mxu0 0.0
        %1661 = vmatprep.subr.mxu0 0.0
        %1662 = vmatpush1.msra.mxu0 0.0
        %1663 = vmatprep.subr.mxu0 0.0
        %1664 = vmatpush1.msra.mxu0 0.0
        %1665 = vmatprep.subr.mxu0 0.0
        %1666 = vmatpush1.msra.mxu0 0.0
        %1667 = vmatprep.subr.mxu0 0.0
        %1668 = vmatpush1.msra.mxu0 0.0
        %1669 = vmatprep.subr.mxu0 0.0
        %1670 = vmatpush1.msra.mxu0 0.0
        %1671 = vmatprep.subr.mxu0 0.0
        %1672 = vmatpush1.msra.mxu0 %v1637
        %1673 = vmatprep.subr.mxu0 0.0
        %1674 = vmatpush2.msra.mxu0 0.0
        %1675 = vmatprep.subr.mxu0 0.0
        %1676 = vmatpush2.msra.mxu0 0.0
        %1677 = vmatprep.subr.mxu0 0.0
        %1678 = vmatpush2.msra.mxu0 0.0
        %1679 = vmatprep.subr.mxu0 0.0
        %1680 = vmatpush2.msra.mxu0 0.0
        %1681 = vmatprep.subr.mxu0 0.0
        %1682 = vmatpush2.msra.mxu0 0.0
        %1683 = vmatprep.subr.mxu0 0.0
        %1684 = vmatpush2.msra.mxu0 0.0
        %1685 = vmatprep.subr.mxu0 0.0
        %1686 = vmatpush2.msra.mxu0 0.0
        %1687 = vmatprep.subr.mxu0 0.0
        %1688 = vmatpush2.msra.mxu0 0.0
        %1689 = vmatprep.subr.mxu0 0.0
        %1690 = vmatpush2.msra.mxu0 0.0
        %1691 = vmatprep.subr.mxu0 0.0
        %1692 = vmatpush2.msra.mxu0 0.0
        %1693 = vmatprep.subr.mxu0 0.0
        %1694 = vmatpush2.msra.mxu0 0.0
        %1695 = vmatprep.subr.mxu0 0.0
        %1696 = vmatpush2.msra.mxu0 0.0
        %1697 = vmatprep.subr.mxu0 0.0
        %1698 = vmatpush2.msra.mxu0 0.0
        %1699 = vmatprep.subr.mxu0 0.0
        %1700 = vmatpush2.msra.mxu0 0.0
        %1701 = vmatprep.subr.mxu0 0.0
        %1702 = vmatpush2.msra.mxu0 0.0
        %1703 = vmatprep.subr.mxu0 0.0
        %1704 = vmatpush2.msra.mxu0 0.0
        %1705 = vmatprep.mubr.f32.mxu0 0.0
        %1706 = vmatmul.mubr.f32.gmra.mxu0 %v1639
        %v1707 = vpop.f32.mrf.mxu0
        %v1708 = vadd.f32 0.0, %v1707
        %v1709 = vpop.f32.mrf.mxu0
        %1710 = vdwg.mxu0
        %v1711 = vadd.f32 %v1469, %v1708
        %v1712 = vadd.f32 %v1711, %v515
        %v1713 = vsel %vm522, %v1712, 0.0
        %1714 = vadd.xlane.f32.xlu0 %v1713
        %v1715 = vpop.xlane.xlu0 %1714
        %v1716 = vrcp.pop 32.0
        %v1717 = vmul.f32 %v1715, %v1716
        %v1718 = vsub.f32 %v1712, %v1717
        %v1719 = vmul.f32 %v1718, %v1718
        %v1720 = vsel %vm522, %v1719, 0.0
        %1721 = vadd.xlane.f32.xlu0 %v1720
        %v1722 = vpop.xlane.xlu0 %1721
        %v1723 = vmul.f32 %v1722, %v1716
        %v1724 = vadd.f32 %v1723, 1e-05
        %v1725 = vrsqrt.pop %v1724
        %v1726 = vmul.f32 %v1718, %v1725
        %v1727 = vld [vmem:[%s7] sm:$0x1]
        %v1729 = vlaneseq
        %v1730 = vshrl.u32 %v1729, 7
        %v1731 = vsub.s32 0, %v1730
        %v1732 = vrot.slane %v1727, %v1731
        %v1734 = vmul.f32 %v1726, %v1732
        %v1735 = vld [vmem:[%s8] sm:$0x1]
        %v1737 = vlaneseq
        %v1738 = vshrl.u32 %v1737, 7
        %v1739 = vsub.s32 0, %v1738
        %v1740 = vrot.slane %v1735, %v1739
        %v1742 = vadd.f32 %v1734, %v1740
        %1743 = vst.msk [vmem:[%s507] sm:$0xff] %vm522, %v1742
        %s1744 = sand.u32 %s248, 1
        %s1745 = scalar_lea.sflag [#allocation4], %s1744
        %s1746 = sand.u32 %s248, 1
        %s1747 = smul.addr %s1746, 8
        %s1748 = scalar_lea.vmem [#allocation14], %s1747
        %s1749 = sand.u32 %s274, 1
        %s1750 = scalar_lea.sflag [#allocation16], %s1749
        %s1751 = sand.u32 %s274, 1
        %s1752 = smul.addr %s1751, 32
        %s1753 = scalar_lea.vmem [#allocation15], %s1752
        // Predicated region
        $region85: #{tpu_custom_call.1} parent=55 // pred_check
          %p1754 = pneg %p258
        $region86: #{tpu_custom_call.1} parent=55 // pred_check_branch
          %1756 = sbr.rel (%p1754) target = $region88
        $region87: #{tpu_custom_call.1} parent=55 // pred_region
          %s1758 = ssub.s32 128, 128
          %1759 = vsyncadd %s1745, %s1758
          %s1760 = smul.addr %s36, 128
          %s1761 = scalar_lea.hbm %s9, %s1760
          %s1763 = sshll.u32 %s1748, 4
          %s1764 = int_to_ptr.vmem [resolvable:$true] %s1763
          %1766 = dma.vmem_to_hbm [thread:$0]  %s1764, 128, %s1761, %s1745
        $region88: #{tpu_custom_call.1} parent=55 // pred_fallthru
          _
        // Predicated region
        $region89: #{tpu_custom_call.1} parent=55 // pred_check
          %p1767 = pneg %p284
        $region90: #{tpu_custom_call.1} parent=55 // pred_check_branch
          %1769 = sbr.rel (%p1767) target = $region92
        $region91: #{tpu_custom_call.1} parent=55 // pred_region
          %s1771 = ssub.s32 512, 512
          %1772 = vsyncadd %s1750, %s1771
          %s1773 = smul.addr %s36, 128
          %s1774 = scalar_lea.hbm %s10, %s1773
          %s1775 = sshll.u32 %s1753, 4
          %s1776 = int_to_ptr.vmem [resolvable:$true] %s1775
          %1781 = dma.vmem_to_hbm [thread:$0]  %s1776, 512, %s1774, %s1750, 128, 256, 8
        $region92: #{tpu_custom_call.1} parent=55 // pred_fallthru
          _
      $region56: #{tpu_custom_call.1} parent=5 // pred_fallthru
        _
      %p1782 = scmp.le.s32.totalorder 2, %s31
      // Predicated region
      $region93: #{tpu_custom_call.1} parent=5 // pred_check
        %p1783 = pneg %p1782
      $region94: #{tpu_custom_call.1} parent=5 // pred_check_branch
        %1785 = sbr.rel (%p1783) target = $region96
      $region95: #{tpu_custom_call.1} parent=5 // pred_region
        %s1786 = ssub.s32 %s31, 2
        // Predicated region
        $region97: #{tpu_custom_call.1} parent=95 // pred_check
          %p1787 = pneg %p264
        $region98: #{tpu_custom_call.1} parent=95 // pred_check_branch
          %1789 = sbr.rel (%p1787) target = $region100
        $region99: #{tpu_custom_call.1} parent=95 // pred_region
          %s1790 = sand.u32 %s249, 1
          %s1791 = scalar_lea.sflag [#allocation4], %s1790
          %s1792 = sand.u32 %s249, 1
          %s1793 = smul.addr %s1792, 8
          %s1794 = scalar_lea.vmem [#allocation14], %s1793
          %1795 = dma.done %s1791, 128
        $region100: #{tpu_custom_call.1} parent=95 // pred_fallthru
          _
        // Predicated region
        $region101: #{tpu_custom_call.1} parent=95 // pred_check
          %p1796 = pneg %p290
        $region102: #{tpu_custom_call.1} parent=95 // pred_check_branch
          %1798 = sbr.rel (%p1796) target = $region104
        $region103: #{tpu_custom_call.1} parent=95 // pred_region
          %s1799 = sand.u32 %s275, 1
          %s1800 = scalar_lea.sflag [#allocation16], %s1799
          %s1801 = sand.u32 %s275, 1
          %s1802 = smul.addr %s1801, 32
          %s1803 = scalar_lea.vmem [#allocation15], %s1802
          %1804 = dma.done %s1800, 512
        $region104: #{tpu_custom_call.1} parent=95 // pred_fallthru
          _
      $region96: #{tpu_custom_call.1} parent=5 // pred_fallthru
        _
    $region6: #{tpu_custom_call.1} parent=1 // loop_footer
      %s35 = sadd.s32 1, %s31
    $region7: #{tpu_custom_call.1} parent=1 // loop_footer_branch
      %30 = sbr.rel target = $region3
    $region8: #{tpu_custom_call.1} parent=1 // loop_exit
      _
    %1805 = vsyncpa [#allocation3], 1
    %s1806 = scalar_lea.sflag [#allocation3], 1
    %1807 = vsyncpa %s1806, 1
    %1808 = vsyncpa [#allocation6], 1
    %s1809 = scalar_lea.sflag [#allocation6], 1
    %1810 = vsyncpa %s1809, 1
    %1811 = vsyncpa [#allocation9], 1
    %1812 = vsyncpa [#allocation12], 1
    %1813 = vsyncpa [#allocation4], 1
    %s1814 = scalar_lea.sflag [#allocation4], 1
    %1815 = vsyncpa %s1814, 1
    %1816 = vsyncpa [#allocation16], 1
    %s1817 = scalar_lea.sflag [#allocation16], 1
    %1818 = vsyncpa %s1817, 1

</llo_original>
